<compile_context>
chip_gen: v5e
topology: v5e:2x2
jax: 0.10.0
libtpu: 0.0.40
codegen_flags: <defaults>
</compile_context>

<pallas_src>
import jax
import jax.numpy as jnp
from jax.experimental import pallas as pl
from jax.experimental.pallas import tpu as pltpu


def _sim2_kernel(f_ref, w_ref, b_ref, g_ref, o_ref):
    dp = f_ref.shape[-1]                       # packed lane width (128)

    f = f_ref[...]                             # (TM, Dp) f32 (kept f32 for residual)

    # Fused linear1 + linear2 over the P packed rows: one bf16 MXU matmul.
    z = jnp.dot(f.astype(jnp.bfloat16), w_ref[...],
                preferred_element_type=jnp.float32) + b_ref[...]    # (TM, 2*Dp)

    # Segmented softmax over 32-lane groups.  The per-physical-row max is a
    # constant shift within every segment (softmax is shift-invariant per
    # segment); the -80 clamp keeps every segment's denominator > 0.
    m = jnp.max(z, axis=-1, keepdims=True)
    p = jnp.exp(jnp.maximum(z - m, -80.0))                          # (TM, 2*Dp)

    # Per-segment sum, broadcast back to each lane, via one small bf16 matmul
    # with a block-diagonal ones matrix (the MXU is otherwise idle here).
    denom = jnp.dot(p.astype(jnp.bfloat16), g_ref[...],
                    preferred_element_type=jnp.float32)             # (TM, 2*Dp)
    sm = p * pl.reciprocal(denom, approx=True)

    # First Dp lanes hold softmax(linear1), last Dp lanes softmax(linear2),
    # already in the packed-row layout -> vreg-aligned static slices.
    o_ref[...] = f + sm[:, :dp] + sm[:, dp:]


def sim2_forward(f, w1, b1, w2, b2, *, tm_phys=512):
    """f: (N, D); w*: (D, D) nn.Linear weights (out, in); b*: (D,). Returns (N, D) f32."""
    N, D = f.shape
    if 128 % D != 0:
        # TODO(synk): fall back to an unpacked (masked-store) path for D that
        # does not divide 128.
        raise NotImplementedError("lane packing assumes D divides 128")
    P = 128 // D                 # logical rows packed per physical 128-lane row
    Dp = P * D                   # = 128

    # ---- pack rows: pad N so the packed row count is a tile multiple.
    n_phys = -(-N // P)
    tm = min(tm_phys, -(-n_phys // 8) * 8)      # packed rows per grid step
    n_phys_pad = -(-n_phys // tm) * tm
    n_pad = n_phys_pad * P
    f32 = f.astype(jnp.float32)
    f_p = jnp.pad(f32, ((0, n_pad - N), (0, 0))).reshape(n_phys_pad, Dp)

    # ---- fused, pre-transposed, block-diagonal weights (built once, resident).
    eye_p = jnp.eye(P, dtype=jnp.float32)
    w_bd = jnp.concatenate(
        [jnp.kron(eye_p, w1.T.astype(jnp.float32)),
         jnp.kron(eye_p, w2.T.astype(jnp.float32))], axis=1,
    ).astype(jnp.bfloat16)                                           # (Dp, 2*Dp)
    b_bd = jnp.concatenate(
        [jnp.tile(b1.astype(jnp.float32), P),
         jnp.tile(b2.astype(jnp.float32), P)]).reshape(1, 2 * Dp)    # (1, 2*Dp)
    # Segment-sum / broadcast matrix: block-diagonal ones over 32-lane groups.
    seg = jnp.kron(jnp.eye(2 * P, dtype=jnp.float32),
                   jnp.ones((D, D), jnp.float32)).astype(jnp.bfloat16)  # (2Dp, 2Dp)

    grid = (n_phys_pad // tm,)
    cost = pl.CostEstimate(
        flops=2 * n_phys_pad * Dp * (2 * Dp) + 2 * n_phys_pad * (2 * Dp) ** 2,
        transcendentals=n_phys_pad * 2 * Dp,
        bytes_accessed=2 * n_phys_pad * Dp * 4 + w_bd.size * 2
                       + seg.size * 2 + b_bd.size * 4,
    )

    out_p = pl.pallas_call(
        _sim2_kernel,
        out_shape=jax.ShapeDtypeStruct((n_phys_pad, Dp), jnp.float32),
        grid_spec=pltpu.PrefetchScalarGridSpec(
            num_scalar_prefetch=0,
            grid=grid,
            in_specs=[
                pl.BlockSpec((tm, Dp), lambda i: (i, 0)),          # f tile (pipelined)
                pl.BlockSpec((Dp, 2 * Dp), lambda i: (0, 0)),      # fused weights: resident
                pl.BlockSpec((1, 2 * Dp), lambda i: (0, 0)),       # fused bias: resident
                pl.BlockSpec((2 * Dp, 2 * Dp), lambda i: (0, 0)),  # segment-sum matrix: resident
            ],
            out_specs=pl.BlockSpec((tm, Dp), lambda i: (i, 0)),
        ),
        compiler_params=pltpu.CompilerParams(
            dimension_semantics=("parallel",),        # rows independent; 2 TCs on v7x
            vmem_limit_bytes=32 * 1024 * 1024,        # explicit, large headroom on all gens
        ),
        cost_estimate=cost,
    )(f_p, w_bd, b_bd, seg)

    return out_p.reshape(n_pad, D)[:N]


def sim2_reference(f, w1, b1, w2, b2):
    z1 = f @ w1.T + b1
    z2 = f @ w2.T + b2
    return f + jax.nn.softmax(z1, axis=-1) + jax.nn.softmax(z2, axis=-1)


if __name__ == "__main__":
    # SIM2(f) with f of shape (numrows, input_dim); big enough to exercise the
    # tiled, pipelined grid (2 steps at TM=512 packed rows).
    N, D = 4096, 32
    key = jax.random.PRNGKey(0)
    f = jax.random.normal(key, (N, D), dtype=jnp.float32)

    # Deterministic parameter init matching reset_parameters():
    w1 = jnp.ones((D, D), jnp.float32)
    b1 = jnp.zeros((D,), jnp.float32)
    w2 = jnp.ones((D, D), jnp.float32)
    b2 = jnp.zeros((D,), jnp.float32)

    out = jax.block_until_ready(sim2_forward(f, w1, b1, w2, b2))
    ref = sim2_reference(f, w1, b1, w2, b2)
    assert out.shape == (N, D)
    # bf16 MXU operands + approx reciprocal -> slightly looser tolerance.
    assert bool(jnp.allclose(out, ref, atol=5e-3, rtol=5e-3))

    # Also exercise the padding path with a tiny, non-divisible row count.
    f_small = jax.random.normal(jax.random.PRNGKey(1), (9, D), dtype=jnp.float32)
    out_s = jax.block_until_ready(sim2_forward(f_small, w1, b1, w2, b2))
    ref_s = sim2_reference(f_small, w1, b1, w2, b2)
    assert bool(jnp.allclose(out_s, ref_s, atol=5e-3, rtol=5e-3))

    print("KERNEL_OK")
</pallas_src>

<mosaic_0001>
module attributes {stable_mosaic.version = 11 : i64} {
  func.func @_sim2_kernel(%arg0: i32, %arg1: memref<512x128xf32, #tpu.memory_space<vmem>>, %arg2: memref<128x256xbf16, #tpu.memory_space<vmem>>, %arg3: memref<1x256xf32, #tpu.memory_space<vmem>>, %arg4: memref<256x256xbf16, #tpu.memory_space<vmem>>, %arg5: memref<512x128xf32, #tpu.memory_space<vmem>>) attributes {dimension_semantics = [#tpu.dimension_semantics<parallel>], iteration_bounds = array<i64: 2>, scalar_prefetch = 0 : i64, scratch_operands = 0 : i64, tpu.core_type = #tpu.core_type<tc>, window_params = [{transform_indices = @transform_0, window_bounds = array<i64: 512, 128>}, {pipeline_mode = #tpu.pipeline_mode<synchronous>, transform_indices = @transform_1, window_bounds = array<i64: 128, 256>}, {pipeline_mode = #tpu.pipeline_mode<synchronous>, transform_indices = @transform_2, window_bounds = array<i64: 1, 256>}, {pipeline_mode = #tpu.pipeline_mode<synchronous>, transform_indices = @transform_3, window_bounds = array<i64: 256, 256>}, {transform_indices = @transform_4, window_bounds = array<i64: 512, 128>}]} {
    %c0 = arith.constant 0 : index
    %c0_0 = arith.constant 0 : index
    %0 = vector.load %arg1[%c0, %c0_0] : memref<512x128xf32, #tpu.memory_space<vmem>>, vector<512x128xf32>
    %1 = arith.truncf %0 : vector<512x128xf32> to vector<512x128xbf16>
    %c0_1 = arith.constant 0 : index
    %c0_2 = arith.constant 0 : index
    %2 = vector.load %arg2[%c0_1, %c0_2] : memref<128x256xbf16, #tpu.memory_space<vmem>>, vector<128x256xbf16>
    %cst = arith.constant dense<0.000000e+00> : vector<512x256xf32>
    %3 = tpu.matmul %1, %2, %cst {dimension_numbers = #tpu.dot_dimension_numbers<[1], [0], [0], [1], [0, 0, 1, 1], [], []>} : vector<512x128xbf16>, vector<128x256xbf16>, vector<512x256xf32> -> vector<512x256xf32>
    %c0_3 = arith.constant 0 : index
    %c0_4 = arith.constant 0 : index
    %4 = vector.load %arg3[%c0_3, %c0_4] : memref<1x256xf32, #tpu.memory_space<vmem>>, vector<1x256xf32>
    %5 = vector.broadcast %4 : vector<1x256xf32> to vector<512x256xf32>
    %6 = arith.addf %3, %5 : vector<512x256xf32>
    %cst_5 = arith.constant dense<0xFF800000> : vector<512xf32>
    %7 = vector.multi_reduction <maximumf>, %6, %cst_5 [1] : vector<512x256xf32> to vector<512xf32>
    %8 = vector.shape_cast %7 : vector<512xf32> to vector<512x1xf32>
    %9 = vector.broadcast %8 : vector<512x1xf32> to vector<512x256xf32>
    %10 = arith.subf %6, %9 : vector<512x256xf32>
    %cst_6 = arith.constant -8.000000e+01 : f32
    %11 = vector.broadcast %cst_6 : f32 to vector<512x256xf32>
    %12 = arith.maximumf %10, %11 : vector<512x256xf32>
    %13 = math.exp %12 : vector<512x256xf32>
    %14 = arith.truncf %13 : vector<512x256xf32> to vector<512x256xbf16>
    %c0_7 = arith.constant 0 : index
    %c0_8 = arith.constant 0 : index
    %15 = vector.load %arg4[%c0_7, %c0_8] : memref<256x256xbf16, #tpu.memory_space<vmem>>, vector<256x256xbf16>
    %cst_9 = arith.constant dense<0.000000e+00> : vector<512x256xf32>
    %16 = tpu.matmul %14, %15, %cst_9 {dimension_numbers = #tpu.dot_dimension_numbers<[1], [0], [0], [1], [0, 0, 1, 1], [], []>} : vector<512x256xbf16>, vector<256x256xbf16>, vector<512x256xf32> -> vector<512x256xf32>
    %17 = tpu.reciprocal %16 {approx = true} : vector<512x256xf32> -> vector<512x256xf32>
    %18 = arith.mulf %13, %17 : vector<512x256xf32>
    %19 = vector.extract_strided_slice %18 {offsets = [0, 0], sizes = [512, 128], strides = [1, 1]} : vector<512x256xf32> to vector<512x128xf32>
    %20 = arith.addf %0, %19 : vector<512x128xf32>
    %21 = vector.extract_strided_slice %18 {offsets = [0, 128], sizes = [512, 128], strides = [1, 1]} : vector<512x256xf32> to vector<512x128xf32>
    %22 = arith.addf %20, %21 : vector<512x128xf32>
    %c0_10 = arith.constant 0 : index
    %c0_11 = arith.constant 0 : index
    %23 = vector.load %arg5[%c0_10, %c0_11] : memref<512x128xf32, #tpu.memory_space<vmem>>, vector<512x128xf32>
    tpu.vector_store %arg5[%c0_10, %c0_11], %22 {strides = array<i32>} : memref<512x128xf32, #tpu.memory_space<vmem>>, vector<512x128xf32>,
    return
  }
  func.func @transform_0(%arg0: i32) -> (i32, i32) {
    %c0_i32 = arith.constant 0 : i32
    %c0_i32_0 = arith.constant 0 : i32
    return %arg0, %c0_i32 : i32, i32
  }
  func.func @transform_1(%arg0: i32) -> (i32, i32) {
    %c0_i32 = arith.constant 0 : i32
    %c0_i32_0 = arith.constant 0 : i32
    %c0_i32_1 = arith.constant 0 : i32
    return %c0_i32, %c0_i32_0 : i32, i32
  }
  func.func @transform_2(%arg0: i32) -> (i32, i32) {
    %c0_i32 = arith.constant 0 : i32
    %c0_i32_0 = arith.constant 0 : i32
    %c0_i32_1 = arith.constant 0 : i32
    return %c0_i32, %c0_i32_0 : i32, i32
  }
  func.func @transform_3(%arg0: i32) -> (i32, i32) {
    %c0_i32 = arith.constant 0 : i32
    %c0_i32_0 = arith.constant 0 : i32
    %c0_i32_1 = arith.constant 0 : i32
    return %c0_i32, %c0_i32_0 : i32, i32
  }
  func.func @transform_4(%arg0: i32) -> (i32, i32) {
    %c0_i32 = arith.constant 0 : i32
    %c0_i32_0 = arith.constant 0 : i32
    return %arg0, %c0_i32 : i32, i32
  }
}

</mosaic_0001>

<llo_original>
// kernel: tpu_custom_call.1
$region0: #{tpu_custom_call.1}
  #allocation0 [shape = 'u32[]', space=smem, size = 0x4, offset = 0x4, fixed_abs, tag = 'smem constant byte address 0x4 - core index']
  #allocation1 [shape = 'u32[72,128]{1,0:T(1,128)}', space=vmem, size = 0x9000, scoped, tag = 'internal scratch']
  %s0 = inlined_call_operand.hbm [shape: f32[1024,128], index: 0, kind: input, shape index: {}]
  %s1 = inlined_call_operand.hbm [shape: bf16[128,256], index: 1, kind: input, shape index: {}]
  %s2 = inlined_call_operand.hbm [shape: f32[1,256], index: 2, kind: input, shape index: {}]
  %s3 = inlined_call_operand.hbm [shape: bf16[256,256], index: 3, kind: input, shape index: {}]
  %s4 = inlined_call_operand.hbm [shape: f32[1024,128], index: 4, kind: output, shape index: {}]
  %s5 = sld [smem:[#allocation0]]
  $region65: #{tpu_custom_call.1} parent=0
    _
  %s7 = ssub.s32 1, %s5
  %s8 = scalar_select 0, %s7, %s5
  $region1: #{tpu_custom_call.1} parent=0
    #allocation2 [shape = 'u8[524288]{0}', space=vmem, size = 0x80000, scoped, tag = 'input window, operand 0']
    #allocation3 [shape = 's32[2]{0}', space=sflag, size = 0x8, scoped, tag = 'scoped memory for tpu_custom_call.1']
    #allocation4 [shape = 's32[2]{0}', space=sflag, size = 0x8, scoped, tag = 'scoped memory for tpu_custom_call.1']
    #allocation5 [shape = 'u8[65536]{0}', space=vmem, size = 0x10000, scoped, tag = 'input window, operand 1, single buffered']
    #allocation6 [shape = 's32[1]{0}', space=sflag, size = 0x4, scoped, tag = 'scoped memory for tpu_custom_call.1']
    #allocation7 [shape = 'u8[1024]{0}', space=vmem, size = 0x400, scoped, tag = 'input window, operand 2, single buffered']
    #allocation8 [shape = 'u8[131072]{0}', space=vmem, size = 0x20000, scoped, tag = 'input window, operand 3, single buffered']
    #allocation9 [shape = 's32[1]{0}', space=sflag, size = 0x4, scoped, tag = 'scoped memory for tpu_custom_call.1']
    #allocation10 [shape = 'u8[524288]{0}', space=vmem, size = 0x80000, scoped, tag = 'output window, operand 0']
    %9 = vsyncpa [#allocation3], 0
    %s10 = scalar_lea.sflag [#allocation3], 1
    %11 = vsyncpa %s10, 0
    %12 = vsyncpa [#allocation6], 0
    %13 = vsyncpa [#allocation9], 0
    %14 = vsyncpa [#allocation4], 0
    %s15 = scalar_lea.sflag [#allocation4], 1
    %16 = vsyncpa %s15, 0
    loop: start=0, step=1, limit=4
    $region2: #{tpu_custom_call.1} parent=1 // loop_pre_header
      _
    $region3: #{tpu_custom_call.1} parent=1 // loop_header
      %s18 = sphi 0, %s22
      %p19 = scmp.ge.s32.totalorder %s18, 4
      %s28 = sphi 0, %s30
      %s31 = sphi 0, %s28
      %s32 = sphi 0, %s31
      %s48 = sphi 0, %s32
      %s52 = sphi 0, %s52
      %s54 = sphi 0, %s52
      %s55 = sphi 0, %s54
      %s69 = sphi 0, %s55
      %s73 = sphi 0, %s73
      %s75 = sphi 0, %s73
      %s76 = sphi 0, %s75
      %s90 = sphi 0, %s76
      %s94 = sphi 0, %s94
      %s96 = sphi 0, %s94
      %s97 = sphi 0, %s96
      %s111 = sphi 0, %s97
      %s117 = sphi 0, %s119
      %s120 = sphi 0, %s117
      %s121 = sphi 0, %s120
      %s137 = sphi 0, %s121
    $region4: #{tpu_custom_call.1} parent=1 // loop_header_branch
      %21 = sbr.rel (%p19) target = $region8
    $region5: #{tpu_custom_call.1} parent=1 // loop_body
      %s23 = ssub.s32 %s18, 1
      %s24 = ssub.s32 %s18, 2
      %s25 = sadd.s32 %s18, 1
      %s26 = ssub.s32 %s18, %s25
      %p27 = scmp.eq.s32.totalorder %s26, 0
      %s29 = sadd.s32 %s28, 1
      %s30 = scalar_select %p27, %s28, %s29
      %p33 = pneg %p27
      %p34 = scmp.eq.s32.totalorder %s18, 1
      %p35 = por %p33, %p34
      %p36 = scmp.ne.s32.totalorder %s28, %s31
      %p37 = scmp.eq.s32.totalorder %s18, 0
      %p38 = por %p36, %p37
      %p39 = scmp.ne.s32.totalorder %s28, %s31
      %p40 = scmp.eq.s32.totalorder %s23, 1
      %p41 = por %p39, %p40
      %p42 = scmp.ne.s32.totalorder %s31, %s32
      %p43 = scmp.eq.s32.totalorder %s23, 0
      %p44 = por %p42, %p43
      %p45 = scmp.ne.s32.totalorder %s31, %s32
      %p46 = scmp.eq.s32.totalorder %s24, 1
      %p47 = por %p45, %p46
      %p49 = scmp.ne.s32.totalorder %s32, %s48
      %p50 = scmp.eq.s32.totalorder %s24, 0
      %p51 = por %p49, %p50
      %s53 = sadd.s32 %s52, 1
      %p56 = scmp.eq.s32.totalorder %s18, 1
      %p57 = scmp.ne.s32.totalorder %s52, %s54
      %p58 = scmp.eq.s32.totalorder %s18, 0
      %p59 = por %p57, %p58
      %p60 = scmp.ne.s32.totalorder %s52, %s54
      %p61 = scmp.eq.s32.totalorder %s23, 1
      %p62 = por %p60, %p61
      %p63 = scmp.ne.s32.totalorder %s54, %s55
      %p64 = scmp.eq.s32.totalorder %s23, 0
      %p65 = por %p63, %p64
      %p66 = scmp.ne.s32.totalorder %s54, %s55
      %p67 = scmp.eq.s32.totalorder %s24, 1
      %p68 = por %p66, %p67
      %p70 = scmp.ne.s32.totalorder %s55, %s69
      %p71 = scmp.eq.s32.totalorder %s24, 0
      %p72 = por %p70, %p71
      %s74 = sadd.s32 %s73, 1
      %p77 = scmp.eq.s32.totalorder %s18, 1
      %p78 = scmp.ne.s32.totalorder %s73, %s75
      %p79 = scmp.eq.s32.totalorder %s18, 0
      %p80 = por %p78, %p79
      %p81 = scmp.ne.s32.totalorder %s73, %s75
      %p82 = scmp.eq.s32.totalorder %s23, 1
      %p83 = por %p81, %p82
      %p84 = scmp.ne.s32.totalorder %s75, %s76
      %p85 = scmp.eq.s32.totalorder %s23, 0
      %p86 = por %p84, %p85
      %p87 = scmp.ne.s32.totalorder %s75, %s76
      %p88 = scmp.eq.s32.totalorder %s24, 1
      %p89 = por %p87, %p88
      %p91 = scmp.ne.s32.totalorder %s76, %s90
      %p92 = scmp.eq.s32.totalorder %s24, 0
      %p93 = por %p91, %p92
      %s95 = sadd.s32 %s94, 1
      %p98 = scmp.eq.s32.totalorder %s18, 1
      %p99 = scmp.ne.s32.totalorder %s94, %s96
      %p100 = scmp.eq.s32.totalorder %s18, 0
      %p101 = por %p99, %p100
      %p102 = scmp.ne.s32.totalorder %s94, %s96
      %p103 = scmp.eq.s32.totalorder %s23, 1
      %p104 = por %p102, %p103
      %p105 = scmp.ne.s32.totalorder %s96, %s97
      %p106 = scmp.eq.s32.totalorder %s23, 0
      %p107 = por %p105, %p106
      %p108 = scmp.ne.s32.totalorder %s96, %s97
      %p109 = scmp.eq.s32.totalorder %s24, 1
      %p110 = por %p108, %p109
      %p112 = scmp.ne.s32.totalorder %s97, %s111
      %p113 = scmp.eq.s32.totalorder %s24, 0
      %p114 = por %p112, %p113
      %s115 = ssub.s32 %s18, %s25
      %p116 = scmp.eq.s32.totalorder %s115, 0
      %s118 = sadd.s32 %s117, 1
      %s119 = scalar_select %p116, %s117, %s118
      %p122 = pneg %p116
      %p123 = scmp.eq.s32.totalorder %s18, 1
      %p124 = por %p122, %p123
      %p125 = scmp.ne.s32.totalorder %s117, %s120
      %p126 = scmp.eq.s32.totalorder %s18, 0
      %p127 = por %p125, %p126
      %p128 = scmp.ne.s32.totalorder %s117, %s120
      %p129 = scmp.eq.s32.totalorder %s23, 1
      %p130 = por %p128, %p129
      %p131 = scmp.ne.s32.totalorder %s120, %s121
      %p132 = scmp.eq.s32.totalorder %s23, 0
      %p133 = por %p131, %p132
      %p134 = scmp.ne.s32.totalorder %s120, %s121
      %p135 = scmp.eq.s32.totalorder %s24, 1
      %p136 = por %p134, %p135
      %p138 = scmp.ne.s32.totalorder %s121, %s137
      %p139 = scmp.eq.s32.totalorder %s24, 0
      %p140 = por %p138, %p139
      %p141 = scmp.le.s32.totalorder 1, %s18
      %p142 = scmp.lt.s32.totalorder %s18, 3
      %p143 = pnand %p141, %p142
      %p144 = pneg %p143
      // Predicated region
      $region9: #{tpu_custom_call.1} parent=5 // pred_check
        _
      $region10: #{tpu_custom_call.1} parent=5 // pred_check_branch
        %146 = sbr.rel (%p143) target = $region12
      $region11: #{tpu_custom_call.1} parent=5 // pred_region
        %s147 = ssub.s32 %s18, 1
        // Predicated region
        $region13: #{tpu_custom_call.1} parent=11 // pred_check
          %p148 = pneg %p65
        $region14: #{tpu_custom_call.1} parent=11 // pred_check_branch
          %150 = sbr.rel (%p148) target = $region16
        $region15: #{tpu_custom_call.1} parent=11 // pred_region
          %152 = vsyncadd [#allocation6], 0
          %s153 = sshll.u32 %s1, 4
          %s154 = int_to_ptr.hbm [resolvable:$true] %s153
          %s155 = sshll.u32 [#allocation5], 4
          %s156 = int_to_ptr.vmem [resolvable:$true] %s155
          %161 = dma.hbm_to_vmem [thread:$0]  %s154, 2048, %s156, [#allocation6], 128, 128, 8
        $region16: #{tpu_custom_call.1} parent=11 // pred_fallthru
          _
        // Predicated region
        $region17: #{tpu_custom_call.1} parent=11 // pred_check
          %p162 = pneg %p86
        $region18: #{tpu_custom_call.1} parent=11 // pred_check_branch
          %164 = sbr.rel (%p162) target = $region20
        $region19: #{tpu_custom_call.1} parent=11 // pred_region
          %166 = vsyncadd [#allocation6], 0
          %s168 = sshll.u32 %s2, 4
          %s169 = int_to_ptr.hbm [resolvable:$true] %s168
          %s170 = sshll.u32 [#allocation7], 4
          %s171 = int_to_ptr.vmem [resolvable:$true] %s170
          %173 = dma.hbm_to_vmem [thread:$0]  %s169, 32, %s171, [#allocation6]
        $region20: #{tpu_custom_call.1} parent=11 // pred_fallthru
          _
        // Predicated region
        $region21: #{tpu_custom_call.1} parent=11 // pred_check
          %p174 = pneg %p107
        $region22: #{tpu_custom_call.1} parent=11 // pred_check_branch
          %176 = sbr.rel (%p174) target = $region24
        $region23: #{tpu_custom_call.1} parent=11 // pred_region
          %178 = vsyncadd [#allocation9], 0
          %s179 = sshll.u32 %s3, 4
          %s180 = int_to_ptr.hbm [resolvable:$true] %s179
          %s181 = sshll.u32 [#allocation8], 4
          %s182 = int_to_ptr.vmem [resolvable:$true] %s181
          %187 = dma.hbm_to_vmem [thread:$0]  %s180, 4096, %s182, [#allocation9], 128, 128, 8
        $region24: #{tpu_custom_call.1} parent=11 // pred_fallthru
          _
      $region12: #{tpu_custom_call.1} parent=5 // pred_fallthru
        _
      %p188 = scmp.lt.s32.totalorder %s18, 2
      // Predicated region
      $region25: #{tpu_custom_call.1} parent=5 // pred_check
        %p189 = pneg %p188
      $region26: #{tpu_custom_call.1} parent=5 // pred_check_branch
        %191 = sbr.rel (%p189) target = $region28
      $region27: #{tpu_custom_call.1} parent=5 // pred_region
        // Predicated region
        $region29: #{tpu_custom_call.1} parent=27 // pred_check
          %p192 = pneg %p38
        $region30: #{tpu_custom_call.1} parent=27 // pred_check_branch
          %194 = sbr.rel (%p192) target = $region32
        $region31: #{tpu_custom_call.1} parent=27 // pred_region
          %s195 = sand.u32 %s28, 1
          %s196 = scalar_lea.sflag [#allocation3], %s195
          %s197 = sand.u32 %s28, 1
          %s198 = smul.addr %s197, 512
          %s199 = scalar_lea.vmem [#allocation2], %s198
          %s200 = smul.u32 64, %s18
          %202 = vsyncadd %s196, 0
          %s203 = smul.addr %s200, 8
          %s204 = scalar_lea.hbm %s0, %s203
          %s205 = sshll.u32 %s204, 4
          %s206 = int_to_ptr.hbm [resolvable:$true] %s205
          %s207 = sshll.u32 %s199, 4
          %s208 = int_to_ptr.vmem [resolvable:$true] %s207
          %213 = dma.hbm_to_vmem [thread:$0]  %s206, 8192, %s208, %s196, 128, 128, 8
        $region32: #{tpu_custom_call.1} parent=27 // pred_fallthru
          _
      $region28: #{tpu_custom_call.1} parent=5 // pred_fallthru
        _
      %p214 = scmp.le.s32.totalorder 1, %s18
      %p215 = scmp.lt.s32.totalorder %s18, 3
      %p216 = pnand %p214, %p215
      %p217 = pneg %p216
      // Predicated region
      $region33: #{tpu_custom_call.1} parent=5 // pred_check
        _
      $region34: #{tpu_custom_call.1} parent=5 // pred_check_branch
        %219 = sbr.rel (%p216) target = $region36
      $region35: #{tpu_custom_call.1} parent=5 // pred_region
        %s220 = ssub.s32 %s18, 1
        %s221 = sand.u32 %s31, 1
        %s222 = scalar_lea.sflag [#allocation3], %s221
        %s223 = sand.u32 %s31, 1
        %s224 = smul.addr %s223, 512
        %s225 = scalar_lea.vmem [#allocation2], %s224
        // Predicated region
        $region37: #{tpu_custom_call.1} parent=35 // pred_check
          %p226 = pneg %p44
        $region38: #{tpu_custom_call.1} parent=35 // pred_check_branch
          %228 = sbr.rel (%p226) target = $region40
        $region39: #{tpu_custom_call.1} parent=35 // pred_region
          %230 = dma.done %s222, 8192
        $region40: #{tpu_custom_call.1} parent=35 // pred_fallthru
          _
        // Predicated region
        $region41: #{tpu_custom_call.1} parent=35 // pred_check
          %p231 = pneg %p65
        $region42: #{tpu_custom_call.1} parent=35 // pred_check_branch
          %233 = sbr.rel (%p231) target = $region44
        $region43: #{tpu_custom_call.1} parent=35 // pred_region
          %235 = dma.done [#allocation6], 2048
        $region44: #{tpu_custom_call.1} parent=35 // pred_fallthru
          _
        // Predicated region
        $region45: #{tpu_custom_call.1} parent=35 // pred_check
          %p236 = pneg %p86
        $region46: #{tpu_custom_call.1} parent=35 // pred_check_branch
          %238 = sbr.rel (%p236) target = $region48
        $region47: #{tpu_custom_call.1} parent=35 // pred_region
          %240 = dma.done [#allocation6], 32
        $region48: #{tpu_custom_call.1} parent=35 // pred_fallthru
          _
        // Predicated region
        $region49: #{tpu_custom_call.1} parent=35 // pred_check
          %p241 = pneg %p107
        $region50: #{tpu_custom_call.1} parent=35 // pred_check_branch
          %243 = sbr.rel (%p241) target = $region52
        $region51: #{tpu_custom_call.1} parent=35 // pred_region
          %245 = dma.done [#allocation9], 4096
        $region52: #{tpu_custom_call.1} parent=35 // pred_fallthru
          _
        %s246 = sand.u32 %s31, 1
        %s247 = scalar_lea.sflag [#allocation3], %s246
        %s248 = sand.u32 %s31, 1
        %s249 = smul.addr %s248, 512
        %s250 = scalar_lea.vmem [#allocation2], %s249
        %p251 = pneg %p44
        %p252 = pneg %p41
        %p253 = pneg %p65
        %p254 = pneg %p62
        %p255 = pneg %p86
        %p256 = pneg %p83
        %p257 = pneg %p107
        %p258 = pneg %p104
        %p259 = pneg %p133
        %p260 = pneg %p130
        %s261 = sand.u32 %s120, 1
        %s262 = scalar_lea.sflag [#allocation4], %s261
        %s263 = sand.u32 %s120, 1
        %s264 = smul.addr %s263, 512
        %s265 = scalar_lea.vmem [#allocation10], %s264
        %s266 = smul.u32 64, %s23
        %s267 = smul.u32 64, %s23
        %v268 = vld [vmem:[%s225] sm:$0xff]
        %v269 = vld [vmem:[%s225 + $0x8] sm:$0xff]
        %v270 = vld [vmem:[%s225 + $0x10] sm:$0xff]
        %v271 = vld [vmem:[%s225 + $0x18] sm:$0xff]
        %v272 = vld [vmem:[%s225 + $0x20] sm:$0xff]
        %v273 = vld [vmem:[%s225 + $0x28] sm:$0xff]
        %v274 = vld [vmem:[%s225 + $0x30] sm:$0xff]
        %v275 = vld [vmem:[%s225 + $0x38] sm:$0xff]
        %v276 = vld [vmem:[%s225 + $0x40] sm:$0xff]
        %v277 = vld [vmem:[%s225 + $0x48] sm:$0xff]
        %v278 = vld [vmem:[%s225 + $0x50] sm:$0xff]
        %v279 = vld [vmem:[%s225 + $0x58] sm:$0xff]
        %v280 = vld [vmem:[%s225 + $0x60] sm:$0xff]
        %v281 = vld [vmem:[%s225 + $0x68] sm:$0xff]
        %v282 = vld [vmem:[%s225 + $0x70] sm:$0xff]
        %v283 = vld [vmem:[%s225 + $0x78] sm:$0xff]
        %v284 = vld [vmem:[%s225 + $0x80] sm:$0xff]
        %v285 = vld [vmem:[%s225 + $0x88] sm:$0xff]
        %v286 = vld [vmem:[%s225 + $0x90] sm:$0xff]
        %v287 = vld [vmem:[%s225 + $0x98] sm:$0xff]
        %v288 = vld [vmem:[%s225 + $0xa0] sm:$0xff]
        %v289 = vld [vmem:[%s225 + $0xa8] sm:$0xff]
        %v290 = vld [vmem:[%s225 + $0xb0] sm:$0xff]
        %v291 = vld [vmem:[%s225 + $0xb8] sm:$0xff]
        %v292 = vld [vmem:[%s225 + $0xc0] sm:$0xff]
        %v293 = vld [vmem:[%s225 + $0xc8] sm:$0xff]
        %v294 = vld [vmem:[%s225 + $0xd0] sm:$0xff]
        %v295 = vld [vmem:[%s225 + $0xd8] sm:$0xff]
        %v296 = vld [vmem:[%s225 + $0xe0] sm:$0xff]
        %v297 = vld [vmem:[%s225 + $0xe8] sm:$0xff]
        %v298 = vld [vmem:[%s225 + $0xf0] sm:$0xff]
        %v299 = vld [vmem:[%s225 + $0xf8] sm:$0xff]
        %v300 = vld [vmem:[%s225 + $0x100] sm:$0xff]
        %v301 = vld [vmem:[%s225 + $0x108] sm:$0xff]
        %v302 = vld [vmem:[%s225 + $0x110] sm:$0xff]
        %v303 = vld [vmem:[%s225 + $0x118] sm:$0xff]
        %v304 = vld [vmem:[%s225 + $0x120] sm:$0xff]
        %v305 = vld [vmem:[%s225 + $0x128] sm:$0xff]
        %v306 = vld [vmem:[%s225 + $0x130] sm:$0xff]
        %v307 = vld [vmem:[%s225 + $0x138] sm:$0xff]
        %v308 = vld [vmem:[%s225 + $0x140] sm:$0xff]
        %v309 = vld [vmem:[%s225 + $0x148] sm:$0xff]
        %v310 = vld [vmem:[%s225 + $0x150] sm:$0xff]
        %v311 = vld [vmem:[%s225 + $0x158] sm:$0xff]
        %v312 = vld [vmem:[%s225 + $0x160] sm:$0xff]
        %v313 = vld [vmem:[%s225 + $0x168] sm:$0xff]
        %v314 = vld [vmem:[%s225 + $0x170] sm:$0xff]
        %v315 = vld [vmem:[%s225 + $0x178] sm:$0xff]
        %v316 = vld [vmem:[%s225 + $0x180] sm:$0xff]
        %v317 = vld [vmem:[%s225 + $0x188] sm:$0xff]
        %v318 = vld [vmem:[%s225 + $0x190] sm:$0xff]
        %v319 = vld [vmem:[%s225 + $0x198] sm:$0xff]
        %v320 = vld [vmem:[%s225 + $0x1a0] sm:$0xff]
        %v321 = vld [vmem:[%s225 + $0x1a8] sm:$0xff]
        %v322 = vld [vmem:[%s225 + $0x1b0] sm:$0xff]
        %v323 = vld [vmem:[%s225 + $0x1b8] sm:$0xff]
        %v324 = vld [vmem:[%s225 + $0x1c0] sm:$0xff]
        %v325 = vld [vmem:[%s225 + $0x1c8] sm:$0xff]
        %v326 = vld [vmem:[%s225 + $0x1d0] sm:$0xff]
        %v327 = vld [vmem:[%s225 + $0x1d8] sm:$0xff]
        %v328 = vld [vmem:[%s225 + $0x1e0] sm:$0xff]
        %v329 = vld [vmem:[%s225 + $0x1e8] sm:$0xff]
        %v330 = vld [vmem:[%s225 + $0x1f0] sm:$0xff]
        %v331 = vld [vmem:[%s225 + $0x1f8] sm:$0xff]
        %v332 = vpack.c.bf16 %v269, %v268
        %v333 = vpack.c.bf16 %v271, %v270
        %v334 = vpack.c.bf16 %v273, %v272
        %v335 = vpack.c.bf16 %v275, %v274
        %v336 = vpack.c.bf16 %v277, %v276
        %v337 = vpack.c.bf16 %v279, %v278
        %v338 = vpack.c.bf16 %v281, %v280
        %v339 = vpack.c.bf16 %v283, %v282
        %v340 = vpack.c.bf16 %v285, %v284
        %v341 = vpack.c.bf16 %v287, %v286
        %v342 = vpack.c.bf16 %v289, %v288
        %v343 = vpack.c.bf16 %v291, %v290
        %v344 = vpack.c.bf16 %v293, %v292
        %v345 = vpack.c.bf16 %v295, %v294
        %v346 = vpack.c.bf16 %v297, %v296
        %v347 = vpack.c.bf16 %v299, %v298
        %v348 = vpack.c.bf16 %v301, %v300
        %v349 = vpack.c.bf16 %v303, %v302
        %v350 = vpack.c.bf16 %v305, %v304
        %v351 = vpack.c.bf16 %v307, %v306
        %v352 = vpack.c.bf16 %v309, %v308
        %v353 = vpack.c.bf16 %v311, %v310
        %v354 = vpack.c.bf16 %v313, %v312
        %v355 = vpack.c.bf16 %v315, %v314
        %v356 = vpack.c.bf16 %v317, %v316
        %v357 = vpack.c.bf16 %v319, %v318
        %v358 = vpack.c.bf16 %v321, %v320
        %v359 = vpack.c.bf16 %v323, %v322
        %v360 = vpack.c.bf16 %v325, %v324
        %v361 = vpack.c.bf16 %v327, %v326
        %v362 = vpack.c.bf16 %v329, %v328
        %v363 = vpack.c.bf16 %v331, %v330
        %v364 = vld [vmem:[#allocation5] sm:$0xff]
        %v365 = vld [vmem:[#allocation5 + $0x8] sm:$0xff]
        %v366 = vld [vmem:[#allocation5 + $0x10] sm:$0xff]
        %v367 = vld [vmem:[#allocation5 + $0x18] sm:$0xff]
        %v368 = vld [vmem:[#allocation5 + $0x20] sm:$0xff]
        %v369 = vld [vmem:[#allocation5 + $0x28] sm:$0xff]
        %v370 = vld [vmem:[#allocation5 + $0x30] sm:$0xff]
        %v371 = vld [vmem:[#allocation5 + $0x38] sm:$0xff]
        %v372 = vld [vmem:[#allocation5 + $0x40] sm:$0xff]
        %v373 = vld [vmem:[#allocation5 + $0x48] sm:$0xff]
        %v374 = vld [vmem:[#allocation5 + $0x50] sm:$0xff]
        %v375 = vld [vmem:[#allocation5 + $0x58] sm:$0xff]
        %v376 = vld [vmem:[#allocation5 + $0x60] sm:$0xff]
        %v377 = vld [vmem:[#allocation5 + $0x68] sm:$0xff]
        %v378 = vld [vmem:[#allocation5 + $0x70] sm:$0xff]
        %v379 = vld [vmem:[#allocation5 + $0x78] sm:$0xff]
        %v380 = vld [vmem:[#allocation7] sm:$0x3]
        %v382 = vperm.slane %v380, 0
        %v383 = vperm.slane %v380, 1
        %v402 = vunpack.c.l.b16 %v364
        %v403 = vunpack.c.h.b16 %v364
        %v404 = vunpack.c.l.b16 %v365
        %v405 = vunpack.c.h.b16 %v365
        %v406 = vunpack.c.l.b16 %v366
        %v407 = vunpack.c.h.b16 %v366
        %v408 = vunpack.c.l.b16 %v367
        %v409 = vunpack.c.h.b16 %v367
        %v410 = vunpack.c.l.b16 %v368
        %v411 = vunpack.c.h.b16 %v368
        %v412 = vunpack.c.l.b16 %v369
        %v413 = vunpack.c.h.b16 %v369
        %v414 = vunpack.c.l.b16 %v370
        %v415 = vunpack.c.h.b16 %v370
        %v416 = vunpack.c.l.b16 %v371
        %v417 = vunpack.c.h.b16 %v371
        %v418 = vunpack.c.l.b16 %v372
        %v419 = vunpack.c.h.b16 %v372
        %v420 = vunpack.c.l.b16 %v373
        %v421 = vunpack.c.h.b16 %v373
        %v422 = vunpack.c.l.b16 %v374
        %v423 = vunpack.c.h.b16 %v374
        %v424 = vunpack.c.l.b16 %v375
        %v425 = vunpack.c.h.b16 %v375
        %v426 = vunpack.c.l.b16 %v376
        %v427 = vunpack.c.h.b16 %v376
        %v428 = vunpack.c.l.b16 %v377
        %v429 = vunpack.c.h.b16 %v377
        %v430 = vunpack.c.l.b16 %v378
        %v431 = vunpack.c.h.b16 %v378
        %v432 = vunpack.c.l.b16 %v379
        %v433 = vunpack.c.h.b16 %v379
        %v434 = vpack.c.b16 %v404, %v402
        %v435 = vpack.c.b16 %v405, %v403
        %v436 = vpack.c.b16 %v408, %v406
        %v437 = vpack.c.b16 %v409, %v407
        %v438 = vpack.c.b16 %v412, %v410
        %v439 = vpack.c.b16 %v413, %v411
        %v440 = vpack.c.b16 %v416, %v414
        %v441 = vpack.c.b16 %v417, %v415
        %v442 = vpack.c.b16 %v420, %v418
        %v443 = vpack.c.b16 %v421, %v419
        %v444 = vpack.c.b16 %v424, %v422
        %v445 = vpack.c.b16 %v425, %v423
        %v446 = vpack.c.b16 %v428, %v426
        %v447 = vpack.c.b16 %v429, %v427
        %v448 = vpack.c.b16 %v432, %v430
        %v449 = vpack.c.b16 %v433, %v431
        %466 = vmatpush.bf16.msra.mxu0 %v448
        %467 = vmatpush.bf16.msra.mxu0 %v446
        %468 = vmatpush.bf16.msra.mxu0 %v444
        %469 = vmatpush.bf16.msra.mxu0 %v442
        %470 = vmatpush.bf16.msra.mxu0 %v440
        %471 = vmatpush.bf16.msra.mxu0 %v438
        %472 = vmatpush.bf16.msra.mxu0 %v436
        %473 = vmatpush.bf16.msra.mxu0 %v434
        %474 = vmatmul.bf16.gmra.mxu0 %v332
        %v475 = vpop.f32.mrf.mxu0
        %v476 = vadd.f32 %v382, %v475
        %v477 = vpop.f32.mrf.mxu0
        %v478 = vadd.f32 %v382, %v477
        %479 = vmatmul.bf16.gmra.mxu0 %v333
        %v480 = vpop.f32.mrf.mxu0
        %v481 = vadd.f32 %v382, %v480
        %v482 = vpop.f32.mrf.mxu0
        %v483 = vadd.f32 %v382, %v482
        %484 = vmatmul.bf16.gmra.mxu0 %v334
        %v485 = vpop.f32.mrf.mxu0
        %v486 = vadd.f32 %v382, %v485
        %v487 = vpop.f32.mrf.mxu0
        %v488 = vadd.f32 %v382, %v487
        %489 = vmatmul.bf16.gmra.mxu0 %v335
        %v490 = vpop.f32.mrf.mxu0
        %v491 = vadd.f32 %v382, %v490
        %v492 = vpop.f32.mrf.mxu0
        %v493 = vadd.f32 %v382, %v492
        %494 = vmatmul.bf16.gmra.mxu0 %v336
        %v495 = vpop.f32.mrf.mxu0
        %v496 = vadd.f32 %v382, %v495
        %v497 = vpop.f32.mrf.mxu0
        %v498 = vadd.f32 %v382, %v497
        %499 = vmatmul.bf16.gmra.mxu0 %v337
        %v500 = vpop.f32.mrf.mxu0
        %v501 = vadd.f32 %v382, %v500
        %v502 = vpop.f32.mrf.mxu0
        %v503 = vadd.f32 %v382, %v502
        %504 = vmatmul.bf16.gmra.mxu0 %v338
        %v505 = vpop.f32.mrf.mxu0
        %v506 = vadd.f32 %v382, %v505
        %v507 = vpop.f32.mrf.mxu0
        %v508 = vadd.f32 %v382, %v507
        %509 = vmatmul.bf16.gmra.mxu0 %v339
        %v510 = vpop.f32.mrf.mxu0
        %v511 = vadd.f32 %v382, %v510
        %v512 = vpop.f32.mrf.mxu0
        %v513 = vadd.f32 %v382, %v512
        %514 = vmatmul.bf16.gmra.mxu0 %v340
        %v515 = vpop.f32.mrf.mxu0
        %v516 = vadd.f32 %v382, %v515
        %v517 = vpop.f32.mrf.mxu0
        %v518 = vadd.f32 %v382, %v517
        %519 = vmatmul.bf16.gmra.mxu0 %v341
        %v520 = vpop.f32.mrf.mxu0
        %v521 = vadd.f32 %v382, %v520
        %v522 = vpop.f32.mrf.mxu0
        %v523 = vadd.f32 %v382, %v522
        %524 = vmatmul.bf16.gmra.mxu0 %v342
        %v525 = vpop.f32.mrf.mxu0
        %v526 = vadd.f32 %v382, %v525
        %v527 = vpop.f32.mrf.mxu0
        %v528 = vadd.f32 %v382, %v527
        %529 = vmatmul.bf16.gmra.mxu0 %v343
        %v530 = vpop.f32.mrf.mxu0
        %v531 = vadd.f32 %v382, %v530
        %v532 = vpop.f32.mrf.mxu0
        %v533 = vadd.f32 %v382, %v532
        %534 = vmatmul.bf16.gmra.mxu0 %v344
        %v535 = vpop.f32.mrf.mxu0
        %v536 = vadd.f32 %v382, %v535
        %v537 = vpop.f32.mrf.mxu0
        %v538 = vadd.f32 %v382, %v537
        %539 = vmatmul.bf16.gmra.mxu0 %v345
        %v540 = vpop.f32.mrf.mxu0
        %v541 = vadd.f32 %v382, %v540
        %v542 = vpop.f32.mrf.mxu0
        %v543 = vadd.f32 %v382, %v542
        %544 = vmatmul.bf16.gmra.mxu0 %v346
        %v545 = vpop.f32.mrf.mxu0
        %v546 = vadd.f32 %v382, %v545
        %v547 = vpop.f32.mrf.mxu0
        %v548 = vadd.f32 %v382, %v547
        %549 = vmatmul.bf16.gmra.mxu0 %v347
        %v550 = vpop.f32.mrf.mxu0
        %v551 = vadd.f32 %v382, %v550
        %v552 = vpop.f32.mrf.mxu0
        %v553 = vadd.f32 %v382, %v552
        %554 = vmatmul.bf16.gmra.mxu0 %v348
        %v555 = vpop.f32.mrf.mxu0
        %v556 = vadd.f32 %v382, %v555
        %v557 = vpop.f32.mrf.mxu0
        %v558 = vadd.f32 %v382, %v557
        %559 = vmatmul.bf16.gmra.mxu0 %v349
        %v560 = vpop.f32.mrf.mxu0
        %v561 = vadd.f32 %v382, %v560
        %v562 = vpop.f32.mrf.mxu0
        %v563 = vadd.f32 %v382, %v562
        %564 = vmatmul.bf16.gmra.mxu0 %v350
        %v565 = vpop.f32.mrf.mxu0
        %v566 = vadd.f32 %v382, %v565
        %v567 = vpop.f32.mrf.mxu0
        %v568 = vadd.f32 %v382, %v567
        %569 = vmatmul.bf16.gmra.mxu0 %v351
        %v570 = vpop.f32.mrf.mxu0
        %v571 = vadd.f32 %v382, %v570
        %v572 = vpop.f32.mrf.mxu0
        %v573 = vadd.f32 %v382, %v572
        %574 = vmatmul.bf16.gmra.mxu0 %v352
        %v575 = vpop.f32.mrf.mxu0
        %v576 = vadd.f32 %v382, %v575
        %v577 = vpop.f32.mrf.mxu0
        %v578 = vadd.f32 %v382, %v577
        %579 = vmatmul.bf16.gmra.mxu0 %v353
        %v580 = vpop.f32.mrf.mxu0
        %v581 = vadd.f32 %v382, %v580
        %v582 = vpop.f32.mrf.mxu0
        %v583 = vadd.f32 %v382, %v582
        %584 = vmatmul.bf16.gmra.mxu0 %v354
        %v585 = vpop.f32.mrf.mxu0
        %v586 = vadd.f32 %v382, %v585
        %v587 = vpop.f32.mrf.mxu0
        %v588 = vadd.f32 %v382, %v587
        %589 = vmatmul.bf16.gmra.mxu0 %v355
        %v590 = vpop.f32.mrf.mxu0
        %v591 = vadd.f32 %v382, %v590
        %v592 = vpop.f32.mrf.mxu0
        %v593 = vadd.f32 %v382, %v592
        %594 = vmatmul.bf16.gmra.mxu0 %v356
        %v595 = vpop.f32.mrf.mxu0
        %v596 = vadd.f32 %v382, %v595
        %v597 = vpop.f32.mrf.mxu0
        %v598 = vadd.f32 %v382, %v597
        %599 = vmatmul.bf16.gmra.mxu0 %v357
        %v600 = vpop.f32.mrf.mxu0
        %v601 = vadd.f32 %v382, %v600
        %v602 = vpop.f32.mrf.mxu0
        %v603 = vadd.f32 %v382, %v602
        %604 = vmatmul.bf16.gmra.mxu0 %v358
        %v605 = vpop.f32.mrf.mxu0
        %v606 = vadd.f32 %v382, %v605
        %v607 = vpop.f32.mrf.mxu0
        %v608 = vadd.f32 %v382, %v607
        %609 = vmatmul.bf16.gmra.mxu0 %v359
        %v610 = vpop.f32.mrf.mxu0
        %v611 = vadd.f32 %v382, %v610
        %v612 = vpop.f32.mrf.mxu0
        %v613 = vadd.f32 %v382, %v612
        %614 = vmatmul.bf16.gmra.mxu0 %v360
        %v615 = vpop.f32.mrf.mxu0
        %v616 = vadd.f32 %v382, %v615
        %v617 = vpop.f32.mrf.mxu0
        %v618 = vadd.f32 %v382, %v617
        %619 = vmatmul.bf16.gmra.mxu0 %v361
        %v620 = vpop.f32.mrf.mxu0
        %v621 = vadd.f32 %v382, %v620
        %v622 = vpop.f32.mrf.mxu0
        %v623 = vadd.f32 %v382, %v622
        %624 = vmatmul.bf16.gmra.mxu0 %v362
        %v625 = vpop.f32.mrf.mxu0
        %v626 = vadd.f32 %v382, %v625
        %v627 = vpop.f32.mrf.mxu0
        %v628 = vadd.f32 %v382, %v627
        %629 = vmatmul.bf16.gmra.mxu0 %v363
        %v630 = vpop.f32.mrf.mxu0
        %v631 = vadd.f32 %v382, %v630
        %v632 = vpop.f32.mrf.mxu0
        %v633 = vadd.f32 %v382, %v632
        %634 = vdwg.mxu0
        %635 = vmatpush.bf16.msra.mxu0 %v449
        %636 = vmatpush.bf16.msra.mxu0 %v447
        %637 = vmatpush.bf16.msra.mxu0 %v445
        %638 = vmatpush.bf16.msra.mxu0 %v443
        %639 = vmatpush.bf16.msra.mxu0 %v441
        %640 = vmatpush.bf16.msra.mxu0 %v439
        %641 = vmatpush.bf16.msra.mxu0 %v437
        %642 = vmatpush.bf16.msra.mxu0 %v435
        %643 = vmatmul.bf16.gmra.mxu0 %v332
        %v644 = vpop.f32.mrf.mxu0
        %v645 = vadd.f32 %v383, %v644
        %v646 = vpop.f32.mrf.mxu0
        %v647 = vadd.f32 %v383, %v646
        %648 = vmatmul.bf16.gmra.mxu0 %v333
        %v649 = vpop.f32.mrf.mxu0
        %v650 = vadd.f32 %v383, %v649
        %v651 = vpop.f32.mrf.mxu0
        %v652 = vadd.f32 %v383, %v651
        %653 = vmatmul.bf16.gmra.mxu0 %v334
        %v654 = vpop.f32.mrf.mxu0
        %v655 = vadd.f32 %v383, %v654
        %v656 = vpop.f32.mrf.mxu0
        %v657 = vadd.f32 %v383, %v656
        %658 = vmatmul.bf16.gmra.mxu0 %v335
        %v659 = vpop.f32.mrf.mxu0
        %v660 = vadd.f32 %v383, %v659
        %v661 = vpop.f32.mrf.mxu0
        %v662 = vadd.f32 %v383, %v661
        %663 = vmatmul.bf16.gmra.mxu0 %v336
        %v664 = vpop.f32.mrf.mxu0
        %v665 = vadd.f32 %v383, %v664
        %v666 = vpop.f32.mrf.mxu0
        %v667 = vadd.f32 %v383, %v666
        %668 = vmatmul.bf16.gmra.mxu0 %v337
        %v669 = vpop.f32.mrf.mxu0
        %v670 = vadd.f32 %v383, %v669
        %v671 = vpop.f32.mrf.mxu0
        %v672 = vadd.f32 %v383, %v671
        %673 = vmatmul.bf16.gmra.mxu0 %v338
        %v674 = vpop.f32.mrf.mxu0
        %v675 = vadd.f32 %v383, %v674
        %v676 = vpop.f32.mrf.mxu0
        %v677 = vadd.f32 %v383, %v676
        %678 = vmatmul.bf16.gmra.mxu0 %v339
        %v679 = vpop.f32.mrf.mxu0
        %v680 = vadd.f32 %v383, %v679
        %v681 = vpop.f32.mrf.mxu0
        %v682 = vadd.f32 %v383, %v681
        %683 = vmatmul.bf16.gmra.mxu0 %v340
        %v684 = vpop.f32.mrf.mxu0
        %v685 = vadd.f32 %v383, %v684
        %v686 = vpop.f32.mrf.mxu0
        %v687 = vadd.f32 %v383, %v686
        %688 = vmatmul.bf16.gmra.mxu0 %v341
        %v689 = vpop.f32.mrf.mxu0
        %v690 = vadd.f32 %v383, %v689
        %v691 = vpop.f32.mrf.mxu0
        %v692 = vadd.f32 %v383, %v691
        %693 = vmatmul.bf16.gmra.mxu0 %v342
        %v694 = vpop.f32.mrf.mxu0
        %v695 = vadd.f32 %v383, %v694
        %v696 = vpop.f32.mrf.mxu0
        %v697 = vadd.f32 %v383, %v696
        %698 = vmatmul.bf16.gmra.mxu0 %v343
        %v699 = vpop.f32.mrf.mxu0
        %v700 = vadd.f32 %v383, %v699
        %v701 = vpop.f32.mrf.mxu0
        %v702 = vadd.f32 %v383, %v701
        %703 = vmatmul.bf16.gmra.mxu0 %v344
        %v704 = vpop.f32.mrf.mxu0
        %v705 = vadd.f32 %v383, %v704
        %v706 = vpop.f32.mrf.mxu0
        %v707 = vadd.f32 %v383, %v706
        %708 = vmatmul.bf16.gmra.mxu0 %v345
        %v709 = vpop.f32.mrf.mxu0
        %v710 = vadd.f32 %v383, %v709
        %v711 = vpop.f32.mrf.mxu0
        %v712 = vadd.f32 %v383, %v711
        %713 = vmatmul.bf16.gmra.mxu0 %v346
        %v714 = vpop.f32.mrf.mxu0
        %v715 = vadd.f32 %v383, %v714
        %v716 = vpop.f32.mrf.mxu0
        %v717 = vadd.f32 %v383, %v716
        %718 = vmatmul.bf16.gmra.mxu0 %v347
        %v719 = vpop.f32.mrf.mxu0
        %v720 = vadd.f32 %v383, %v719
        %v721 = vpop.f32.mrf.mxu0
        %v722 = vadd.f32 %v383, %v721
        %723 = vmatmul.bf16.gmra.mxu0 %v348
        %v724 = vpop.f32.mrf.mxu0
        %v725 = vadd.f32 %v383, %v724
        %v726 = vpop.f32.mrf.mxu0
        %v727 = vadd.f32 %v383, %v726
        %728 = vmatmul.bf16.gmra.mxu0 %v349
        %v729 = vpop.f32.mrf.mxu0
        %v730 = vadd.f32 %v383, %v729
        %v731 = vpop.f32.mrf.mxu0
        %v732 = vadd.f32 %v383, %v731
        %733 = vmatmul.bf16.gmra.mxu0 %v350
        %v734 = vpop.f32.mrf.mxu0
        %v735 = vadd.f32 %v383, %v734
        %v736 = vpop.f32.mrf.mxu0
        %v737 = vadd.f32 %v383, %v736
        %738 = vmatmul.bf16.gmra.mxu0 %v351
        %v739 = vpop.f32.mrf.mxu0
        %v740 = vadd.f32 %v383, %v739
        %v741 = vpop.f32.mrf.mxu0
        %v742 = vadd.f32 %v383, %v741
        %743 = vmatmul.bf16.gmra.mxu0 %v352
        %v744 = vpop.f32.mrf.mxu0
        %v745 = vadd.f32 %v383, %v744
        %v746 = vpop.f32.mrf.mxu0
        %v747 = vadd.f32 %v383, %v746
        %748 = vmatmul.bf16.gmra.mxu0 %v353
        %v749 = vpop.f32.mrf.mxu0
        %v750 = vadd.f32 %v383, %v749
        %v751 = vpop.f32.mrf.mxu0
        %v752 = vadd.f32 %v383, %v751
        %753 = vmatmul.bf16.gmra.mxu0 %v354
        %v754 = vpop.f32.mrf.mxu0
        %v755 = vadd.f32 %v383, %v754
        %v756 = vpop.f32.mrf.mxu0
        %v757 = vadd.f32 %v383, %v756
        %758 = vmatmul.bf16.gmra.mxu0 %v355
        %v759 = vpop.f32.mrf.mxu0
        %v760 = vadd.f32 %v383, %v759
        %v761 = vpop.f32.mrf.mxu0
        %v762 = vadd.f32 %v383, %v761
        %763 = vmatmul.bf16.gmra.mxu0 %v356
        %v764 = vpop.f32.mrf.mxu0
        %v765 = vadd.f32 %v383, %v764
        %v766 = vpop.f32.mrf.mxu0
        %v767 = vadd.f32 %v383, %v766
        %768 = vmatmul.bf16.gmra.mxu0 %v357
        %v769 = vpop.f32.mrf.mxu0
        %v770 = vadd.f32 %v383, %v769
        %v771 = vpop.f32.mrf.mxu0
        %v772 = vadd.f32 %v383, %v771
        %773 = vmatmul.bf16.gmra.mxu0 %v358
        %v774 = vpop.f32.mrf.mxu0
        %v775 = vadd.f32 %v383, %v774
        %v776 = vpop.f32.mrf.mxu0
        %v777 = vadd.f32 %v383, %v776
        %778 = vmatmul.bf16.gmra.mxu0 %v359
        %v779 = vpop.f32.mrf.mxu0
        %v780 = vadd.f32 %v383, %v779
        %v781 = vpop.f32.mrf.mxu0
        %v782 = vadd.f32 %v383, %v781
        %783 = vmatmul.bf16.gmra.mxu0 %v360
        %v784 = vpop.f32.mrf.mxu0
        %v785 = vadd.f32 %v383, %v784
        %v786 = vpop.f32.mrf.mxu0
        %v787 = vadd.f32 %v383, %v786
        %788 = vmatmul.bf16.gmra.mxu0 %v361
        %v789 = vpop.f32.mrf.mxu0
        %v790 = vadd.f32 %v383, %v789
        %v791 = vpop.f32.mrf.mxu0
        %v792 = vadd.f32 %v383, %v791
        %793 = vmatmul.bf16.gmra.mxu0 %v362
        %v794 = vpop.f32.mrf.mxu0
        %v795 = vadd.f32 %v383, %v794
        %v796 = vpop.f32.mrf.mxu0
        %v797 = vadd.f32 %v383, %v796
        %798 = vmatmul.bf16.gmra.mxu0 %v363
        %v799 = vpop.f32.mrf.mxu0
        %v800 = vadd.f32 %v383, %v799
        %v801 = vpop.f32.mrf.mxu0
        %v802 = vadd.f32 %v383, %v801
        %803 = vdwg.mxu0
        %v804 = vmax.f32 %v476, %v645
        %805 = vmax.xlane.f32.xlu0 %v804
        %v806 = vpop.xlane.xlu0 %805
        %v807 = vmax.f32 %v478, %v647
        %808 = vmax.xlane.f32.xlu0 %v807
        %v809 = vpop.xlane.xlu0 %808
        %v810 = vmax.f32 %v481, %v650
        %811 = vmax.xlane.f32.xlu0 %v810
        %v812 = vpop.xlane.xlu0 %811
        %v813 = vmax.f32 %v483, %v652
        %814 = vmax.xlane.f32.xlu0 %v813
        %v815 = vpop.xlane.xlu0 %814
        %v816 = vmax.f32 %v486, %v655
        %817 = vmax.xlane.f32.xlu0 %v816
        %v818 = vpop.xlane.xlu0 %817
        %v819 = vmax.f32 %v488, %v657
        %820 = vmax.xlane.f32.xlu0 %v819
        %v821 = vpop.xlane.xlu0 %820
        %v822 = vmax.f32 %v491, %v660
        %823 = vmax.xlane.f32.xlu0 %v822
        %v824 = vpop.xlane.xlu0 %823
        %v825 = vmax.f32 %v493, %v662
        %826 = vmax.xlane.f32.xlu0 %v825
        %v827 = vpop.xlane.xlu0 %826
        %v828 = vmax.f32 %v496, %v665
        %829 = vmax.xlane.f32.xlu0 %v828
        %v830 = vpop.xlane.xlu0 %829
        %v831 = vmax.f32 %v498, %v667
        %832 = vmax.xlane.f32.xlu0 %v831
        %v833 = vpop.xlane.xlu0 %832
        %v834 = vmax.f32 %v501, %v670
        %835 = vmax.xlane.f32.xlu0 %v834
        %v836 = vpop.xlane.xlu0 %835
        %v837 = vmax.f32 %v503, %v672
        %838 = vmax.xlane.f32.xlu0 %v837
        %v839 = vpop.xlane.xlu0 %838
        %v840 = vmax.f32 %v506, %v675
        %841 = vmax.xlane.f32.xlu0 %v840
        %v842 = vpop.xlane.xlu0 %841
        %v843 = vmax.f32 %v508, %v677
        %844 = vmax.xlane.f32.xlu0 %v843
        %v845 = vpop.xlane.xlu0 %844
        %v846 = vmax.f32 %v511, %v680
        %847 = vmax.xlane.f32.xlu0 %v846
        %v848 = vpop.xlane.xlu0 %847
        %v849 = vmax.f32 %v513, %v682
        %850 = vmax.xlane.f32.xlu0 %v849
        %v851 = vpop.xlane.xlu0 %850
        %v852 = vmax.f32 %v516, %v685
        %853 = vmax.xlane.f32.xlu0 %v852
        %v854 = vpop.xlane.xlu0 %853
        %v855 = vmax.f32 %v518, %v687
        %856 = vmax.xlane.f32.xlu0 %v855
        %v857 = vpop.xlane.xlu0 %856
        %v858 = vmax.f32 %v521, %v690
        %859 = vmax.xlane.f32.xlu0 %v858
        %v860 = vpop.xlane.xlu0 %859
        %v861 = vmax.f32 %v523, %v692
        %862 = vmax.xlane.f32.xlu0 %v861
        %v863 = vpop.xlane.xlu0 %862
        %v864 = vmax.f32 %v526, %v695
        %865 = vmax.xlane.f32.xlu0 %v864
        %v866 = vpop.xlane.xlu0 %865
        %v867 = vmax.f32 %v528, %v697
        %868 = vmax.xlane.f32.xlu0 %v867
        %v869 = vpop.xlane.xlu0 %868
        %v870 = vmax.f32 %v531, %v700
        %871 = vmax.xlane.f32.xlu0 %v870
        %v872 = vpop.xlane.xlu0 %871
        %v873 = vmax.f32 %v533, %v702
        %874 = vmax.xlane.f32.xlu0 %v873
        %v875 = vpop.xlane.xlu0 %874
        %v876 = vmax.f32 %v536, %v705
        %877 = vmax.xlane.f32.xlu0 %v876
        %v878 = vpop.xlane.xlu0 %877
        %v879 = vmax.f32 %v538, %v707
        %880 = vmax.xlane.f32.xlu0 %v879
        %v881 = vpop.xlane.xlu0 %880
        %v882 = vmax.f32 %v541, %v710
        %883 = vmax.xlane.f32.xlu0 %v882
        %v884 = vpop.xlane.xlu0 %883
        %v885 = vmax.f32 %v543, %v712
        %886 = vmax.xlane.f32.xlu0 %v885
        %v887 = vpop.xlane.xlu0 %886
        %v888 = vmax.f32 %v546, %v715
        %889 = vmax.xlane.f32.xlu0 %v888
        %v890 = vpop.xlane.xlu0 %889
        %v891 = vmax.f32 %v548, %v717
        %892 = vmax.xlane.f32.xlu0 %v891
        %v893 = vpop.xlane.xlu0 %892
        %v894 = vmax.f32 %v551, %v720
        %895 = vmax.xlane.f32.xlu0 %v894
        %v896 = vpop.xlane.xlu0 %895
        %v897 = vmax.f32 %v553, %v722
        %898 = vmax.xlane.f32.xlu0 %v897
        %v899 = vpop.xlane.xlu0 %898
        %v900 = vmax.f32 %v556, %v725
        %901 = vmax.xlane.f32.xlu0 %v900
        %v902 = vpop.xlane.xlu0 %901
        %v903 = vmax.f32 %v558, %v727
        %904 = vmax.xlane.f32.xlu0 %v903
        %v905 = vpop.xlane.xlu0 %904
        %v906 = vmax.f32 %v561, %v730
        %907 = vmax.xlane.f32.xlu0 %v906
        %v908 = vpop.xlane.xlu0 %907
        %v909 = vmax.f32 %v563, %v732
        %910 = vmax.xlane.f32.xlu0 %v909
        %v911 = vpop.xlane.xlu0 %910
        %v912 = vmax.f32 %v566, %v735
        %913 = vmax.xlane.f32.xlu0 %v912
        %v914 = vpop.xlane.xlu0 %913
        %v915 = vmax.f32 %v568, %v737
        %916 = vmax.xlane.f32.xlu0 %v915
        %v917 = vpop.xlane.xlu0 %916
        %v918 = vmax.f32 %v571, %v740
        %919 = vmax.xlane.f32.xlu0 %v918
        %v920 = vpop.xlane.xlu0 %919
        %v921 = vmax.f32 %v573, %v742
        %922 = vmax.xlane.f32.xlu0 %v921
        %v923 = vpop.xlane.xlu0 %922
        %v924 = vmax.f32 %v576, %v745
        %925 = vmax.xlane.f32.xlu0 %v924
        %v926 = vpop.xlane.xlu0 %925
        %v927 = vmax.f32 %v578, %v747
        %928 = vmax.xlane.f32.xlu0 %v927
        %v929 = vpop.xlane.xlu0 %928
        %v930 = vmax.f32 %v581, %v750
        %931 = vmax.xlane.f32.xlu0 %v930
        %v932 = vpop.xlane.xlu0 %931
        %v933 = vmax.f32 %v583, %v752
        %934 = vmax.xlane.f32.xlu0 %v933
        %v935 = vpop.xlane.xlu0 %934
        %v936 = vmax.f32 %v586, %v755
        %937 = vmax.xlane.f32.xlu0 %v936
        %v938 = vpop.xlane.xlu0 %937
        %v939 = vmax.f32 %v588, %v757
        %940 = vmax.xlane.f32.xlu0 %v939
        %v941 = vpop.xlane.xlu0 %940
        %v942 = vmax.f32 %v591, %v760
        %943 = vmax.xlane.f32.xlu0 %v942
        %v944 = vpop.xlane.xlu0 %943
        %v945 = vmax.f32 %v593, %v762
        %946 = vmax.xlane.f32.xlu0 %v945
        %v947 = vpop.xlane.xlu0 %946
        %v948 = vmax.f32 %v596, %v765
        %949 = vmax.xlane.f32.xlu0 %v948
        %v950 = vpop.xlane.xlu0 %949
        %v951 = vmax.f32 %v598, %v767
        %952 = vmax.xlane.f32.xlu0 %v951
        %v953 = vpop.xlane.xlu0 %952
        %v954 = vmax.f32 %v601, %v770
        %955 = vmax.xlane.f32.xlu0 %v954
        %v956 = vpop.xlane.xlu0 %955
        %v957 = vmax.f32 %v603, %v772
        %958 = vmax.xlane.f32.xlu0 %v957
        %v959 = vpop.xlane.xlu0 %958
        %v960 = vmax.f32 %v606, %v775
        %961 = vmax.xlane.f32.xlu0 %v960
        %v962 = vpop.xlane.xlu0 %961
        %v963 = vmax.f32 %v608, %v777
        %964 = vmax.xlane.f32.xlu0 %v963
        %v965 = vpop.xlane.xlu0 %964
        %v966 = vmax.f32 %v611, %v780
        %967 = vmax.xlane.f32.xlu0 %v966
        %v968 = vpop.xlane.xlu0 %967
        %v969 = vmax.f32 %v613, %v782
        %970 = vmax.xlane.f32.xlu0 %v969
        %v971 = vpop.xlane.xlu0 %970
        %v972 = vmax.f32 %v616, %v785
        %973 = vmax.xlane.f32.xlu0 %v972
        %v974 = vpop.xlane.xlu0 %973
        %v975 = vmax.f32 %v618, %v787
        %976 = vmax.xlane.f32.xlu0 %v975
        %v977 = vpop.xlane.xlu0 %976
        %v978 = vmax.f32 %v621, %v790
        %979 = vmax.xlane.f32.xlu0 %v978
        %v980 = vpop.xlane.xlu0 %979
        %v981 = vmax.f32 %v623, %v792
        %982 = vmax.xlane.f32.xlu0 %v981
        %v983 = vpop.xlane.xlu0 %982
        %v984 = vmax.f32 %v626, %v795
        %985 = vmax.xlane.f32.xlu0 %v984
        %v986 = vpop.xlane.xlu0 %985
        %v987 = vmax.f32 %v628, %v797
        %988 = vmax.xlane.f32.xlu0 %v987
        %v989 = vpop.xlane.xlu0 %988
        %v990 = vmax.f32 %v631, %v800
        %991 = vmax.xlane.f32.xlu0 %v990
        %v992 = vpop.xlane.xlu0 %991
        %v993 = vmax.f32 %v633, %v802
        %994 = vmax.xlane.f32.xlu0 %v993
        %v995 = vpop.xlane.xlu0 %994
        %v996 = vsub.f32 %v476, %v806
        %v997 = vsub.f32 %v645, %v806
        %v998 = vsub.f32 %v478, %v809
        %v999 = vsub.f32 %v647, %v809
        %v1000 = vsub.f32 %v481, %v812
        %v1001 = vsub.f32 %v650, %v812
        %v1002 = vsub.f32 %v483, %v815
        %v1003 = vsub.f32 %v652, %v815
        %v1004 = vsub.f32 %v486, %v818
        %v1005 = vsub.f32 %v655, %v818
        %v1006 = vsub.f32 %v488, %v821
        %v1007 = vsub.f32 %v657, %v821
        %v1008 = vsub.f32 %v491, %v824
        %v1009 = vsub.f32 %v660, %v824
        %v1010 = vsub.f32 %v493, %v827
        %v1011 = vsub.f32 %v662, %v827
        %v1012 = vsub.f32 %v496, %v830
        %v1013 = vsub.f32 %v665, %v830
        %v1014 = vsub.f32 %v498, %v833
        %v1015 = vsub.f32 %v667, %v833
        %v1016 = vsub.f32 %v501, %v836
        %v1017 = vsub.f32 %v670, %v836
        %v1018 = vsub.f32 %v503, %v839
        %v1019 = vsub.f32 %v672, %v839
        %v1020 = vsub.f32 %v506, %v842
        %v1021 = vsub.f32 %v675, %v842
        %v1022 = vsub.f32 %v508, %v845
        %v1023 = vsub.f32 %v677, %v845
        %v1024 = vsub.f32 %v511, %v848
        %v1025 = vsub.f32 %v680, %v848
        %v1026 = vsub.f32 %v513, %v851
        %v1027 = vsub.f32 %v682, %v851
        %v1028 = vsub.f32 %v516, %v854
        %v1029 = vsub.f32 %v685, %v854
        %v1030 = vsub.f32 %v518, %v857
        %v1031 = vsub.f32 %v687, %v857
        %v1032 = vsub.f32 %v521, %v860
        %v1033 = vsub.f32 %v690, %v860
        %v1034 = vsub.f32 %v523, %v863
        %v1035 = vsub.f32 %v692, %v863
        %v1036 = vsub.f32 %v526, %v866
        %v1037 = vsub.f32 %v695, %v866
        %v1038 = vsub.f32 %v528, %v869
        %v1039 = vsub.f32 %v697, %v869
        %v1040 = vsub.f32 %v531, %v872
        %v1041 = vsub.f32 %v700, %v872
        %v1042 = vsub.f32 %v533, %v875
        %v1043 = vsub.f32 %v702, %v875
        %v1044 = vsub.f32 %v536, %v878
        %v1045 = vsub.f32 %v705, %v878
        %v1046 = vsub.f32 %v538, %v881
        %v1047 = vsub.f32 %v707, %v881
        %v1048 = vsub.f32 %v541, %v884
        %v1049 = vsub.f32 %v710, %v884
        %v1050 = vsub.f32 %v543, %v887
        %v1051 = vsub.f32 %v712, %v887
        %v1052 = vsub.f32 %v546, %v890
        %v1053 = vsub.f32 %v715, %v890
        %v1054 = vsub.f32 %v548, %v893
        %v1055 = vsub.f32 %v717, %v893
        %v1056 = vsub.f32 %v551, %v896
        %v1057 = vsub.f32 %v720, %v896
        %v1058 = vsub.f32 %v553, %v899
        %v1059 = vsub.f32 %v722, %v899
        %v1060 = vsub.f32 %v556, %v902
        %v1061 = vsub.f32 %v725, %v902
        %v1062 = vsub.f32 %v558, %v905
        %v1063 = vsub.f32 %v727, %v905
        %v1064 = vsub.f32 %v561, %v908
        %v1065 = vsub.f32 %v730, %v908
        %v1066 = vsub.f32 %v563, %v911
        %v1067 = vsub.f32 %v732, %v911
        %v1068 = vsub.f32 %v566, %v914
        %v1069 = vsub.f32 %v735, %v914
        %v1070 = vsub.f32 %v568, %v917
        %v1071 = vsub.f32 %v737, %v917
        %v1072 = vsub.f32 %v571, %v920
        %v1073 = vsub.f32 %v740, %v920
        %v1074 = vsub.f32 %v573, %v923
        %v1075 = vsub.f32 %v742, %v923
        %v1076 = vsub.f32 %v576, %v926
        %v1077 = vsub.f32 %v745, %v926
        %v1078 = vsub.f32 %v578, %v929
        %v1079 = vsub.f32 %v747, %v929
        %v1080 = vsub.f32 %v581, %v932
        %v1081 = vsub.f32 %v750, %v932
        %v1082 = vsub.f32 %v583, %v935
        %v1083 = vsub.f32 %v752, %v935
        %v1084 = vsub.f32 %v586, %v938
        %v1085 = vsub.f32 %v755, %v938
        %v1086 = vsub.f32 %v588, %v941
        %v1087 = vsub.f32 %v757, %v941
        %v1088 = vsub.f32 %v591, %v944
        %v1089 = vsub.f32 %v760, %v944
        %v1090 = vsub.f32 %v593, %v947
        %v1091 = vsub.f32 %v762, %v947
        %v1092 = vsub.f32 %v596, %v950
        %v1093 = vsub.f32 %v765, %v950
        %v1094 = vsub.f32 %v598, %v953
        %v1095 = vsub.f32 %v767, %v953
        %v1096 = vsub.f32 %v601, %v956
        %v1097 = vsub.f32 %v770, %v956
        %v1098 = vsub.f32 %v603, %v959
        %v1099 = vsub.f32 %v772, %v959
        %v1100 = vsub.f32 %v606, %v962
        %v1101 = vsub.f32 %v775, %v962
        %v1102 = vsub.f32 %v608, %v965
        %v1103 = vsub.f32 %v777, %v965
        %v1104 = vsub.f32 %v611, %v968
        %v1105 = vsub.f32 %v780, %v968
        %v1106 = vsub.f32 %v613, %v971
        %v1107 = vsub.f32 %v782, %v971
        %v1108 = vsub.f32 %v616, %v974
        %v1109 = vsub.f32 %v785, %v974
        %v1110 = vsub.f32 %v618, %v977
        %v1111 = vsub.f32 %v787, %v977
        %v1112 = vsub.f32 %v621, %v980
        %v1113 = vsub.f32 %v790, %v980
        %v1114 = vsub.f32 %v623, %v983
        %v1115 = vsub.f32 %v792, %v983
        %v1116 = vsub.f32 %v626, %v986
        %v1117 = vsub.f32 %v795, %v986
        %v1118 = vsub.f32 %v628, %v989
        %v1119 = vsub.f32 %v797, %v989
        %v1120 = vsub.f32 %v631, %v992
        %v1121 = vsub.f32 %v800, %v992
        %v1122 = vsub.f32 %v633, %v995
        %v1123 = vsub.f32 %v802, %v995
        %v1124 = vmax.f32 %v996, -80.0
        %v1125 = vmax.f32 %v997, -80.0
        %v1126 = vmax.f32 %v998, -80.0
        %v1127 = vmax.f32 %v999, -80.0
        %v1128 = vmax.f32 %v1000, -80.0
        %v1129 = vmax.f32 %v1001, -80.0
        %v1130 = vmax.f32 %v1002, -80.0
        %v1131 = vmax.f32 %v1003, -80.0
        %v1132 = vmax.f32 %v1004, -80.0
        %v1133 = vmax.f32 %v1005, -80.0
        %v1134 = vmax.f32 %v1006, -80.0
        %v1135 = vmax.f32 %v1007, -80.0
        %v1136 = vmax.f32 %v1008, -80.0
        %v1137 = vmax.f32 %v1009, -80.0
        %v1138 = vmax.f32 %v1010, -80.0
        %v1139 = vmax.f32 %v1011, -80.0
        %v1140 = vmax.f32 %v1012, -80.0
        %v1141 = vmax.f32 %v1013, -80.0
        %v1142 = vmax.f32 %v1014, -80.0
        %v1143 = vmax.f32 %v1015, -80.0
        %v1144 = vmax.f32 %v1016, -80.0
        %v1145 = vmax.f32 %v1017, -80.0
        %v1146 = vmax.f32 %v1018, -80.0
        %v1147 = vmax.f32 %v1019, -80.0
        %v1148 = vmax.f32 %v1020, -80.0
        %v1149 = vmax.f32 %v1021, -80.0
        %v1150 = vmax.f32 %v1022, -80.0
        %v1151 = vmax.f32 %v1023, -80.0
        %v1152 = vmax.f32 %v1024, -80.0
        %v1153 = vmax.f32 %v1025, -80.0
        %v1154 = vmax.f32 %v1026, -80.0
        %v1155 = vmax.f32 %v1027, -80.0
        %v1156 = vmax.f32 %v1028, -80.0
        %v1157 = vmax.f32 %v1029, -80.0
        %v1158 = vmax.f32 %v1030, -80.0
        %v1159 = vmax.f32 %v1031, -80.0
        %v1160 = vmax.f32 %v1032, -80.0
        %v1161 = vmax.f32 %v1033, -80.0
        %v1162 = vmax.f32 %v1034, -80.0
        %v1163 = vmax.f32 %v1035, -80.0
        %v1164 = vmax.f32 %v1036, -80.0
        %v1165 = vmax.f32 %v1037, -80.0
        %v1166 = vmax.f32 %v1038, -80.0
        %v1167 = vmax.f32 %v1039, -80.0
        %v1168 = vmax.f32 %v1040, -80.0
        %v1169 = vmax.f32 %v1041, -80.0
        %v1170 = vmax.f32 %v1042, -80.0
        %v1171 = vmax.f32 %v1043, -80.0
        %v1172 = vmax.f32 %v1044, -80.0
        %v1173 = vmax.f32 %v1045, -80.0
        %v1174 = vmax.f32 %v1046, -80.0
        %v1175 = vmax.f32 %v1047, -80.0
        %v1176 = vmax.f32 %v1048, -80.0
        %v1177 = vmax.f32 %v1049, -80.0
        %v1178 = vmax.f32 %v1050, -80.0
        %v1179 = vmax.f32 %v1051, -80.0
        %v1180 = vmax.f32 %v1052, -80.0
        %v1181 = vmax.f32 %v1053, -80.0
        %v1182 = vmax.f32 %v1054, -80.0
        %v1183 = vmax.f32 %v1055, -80.0
        %v1184 = vmax.f32 %v1056, -80.0
        %v1185 = vmax.f32 %v1057, -80.0
        %v1186 = vmax.f32 %v1058, -80.0
        %v1187 = vmax.f32 %v1059, -80.0
        %v1188 = vmax.f32 %v1060, -80.0
        %v1189 = vmax.f32 %v1061, -80.0
        %v1190 = vmax.f32 %v1062, -80.0
        %v1191 = vmax.f32 %v1063, -80.0
        %v1192 = vmax.f32 %v1064, -80.0
        %v1193 = vmax.f32 %v1065, -80.0
        %v1194 = vmax.f32 %v1066, -80.0
        %v1195 = vmax.f32 %v1067, -80.0
        %v1196 = vmax.f32 %v1068, -80.0
        %v1197 = vmax.f32 %v1069, -80.0
        %v1198 = vmax.f32 %v1070, -80.0
        %v1199 = vmax.f32 %v1071, -80.0
        %v1200 = vmax.f32 %v1072, -80.0
        %v1201 = vmax.f32 %v1073, -80.0
        %v1202 = vmax.f32 %v1074, -80.0
        %v1203 = vmax.f32 %v1075, -80.0
        %v1204 = vmax.f32 %v1076, -80.0
        %v1205 = vmax.f32 %v1077, -80.0
        %v1206 = vmax.f32 %v1078, -80.0
        %v1207 = vmax.f32 %v1079, -80.0
        %v1208 = vmax.f32 %v1080, -80.0
        %v1209 = vmax.f32 %v1081, -80.0
        %v1210 = vmax.f32 %v1082, -80.0
        %v1211 = vmax.f32 %v1083, -80.0
        %v1212 = vmax.f32 %v1084, -80.0
        %v1213 = vmax.f32 %v1085, -80.0
        %v1214 = vmax.f32 %v1086, -80.0
        %v1215 = vmax.f32 %v1087, -80.0
        %v1216 = vmax.f32 %v1088, -80.0
        %v1217 = vmax.f32 %v1089, -80.0
        %v1218 = vmax.f32 %v1090, -80.0
        %v1219 = vmax.f32 %v1091, -80.0
        %v1220 = vmax.f32 %v1092, -80.0
        %v1221 = vmax.f32 %v1093, -80.0
        %v1222 = vmax.f32 %v1094, -80.0
        %v1223 = vmax.f32 %v1095, -80.0
        %v1224 = vmax.f32 %v1096, -80.0
        %v1225 = vmax.f32 %v1097, -80.0
        %v1226 = vmax.f32 %v1098, -80.0
        %v1227 = vmax.f32 %v1099, -80.0
        %v1228 = vmax.f32 %v1100, -80.0
        %v1229 = vmax.f32 %v1101, -80.0
        %v1230 = vmax.f32 %v1102, -80.0
        %v1231 = vmax.f32 %v1103, -80.0
        %v1232 = vmax.f32 %v1104, -80.0
        %v1233 = vmax.f32 %v1105, -80.0
        %v1234 = vmax.f32 %v1106, -80.0
        %v1235 = vmax.f32 %v1107, -80.0
        %v1236 = vmax.f32 %v1108, -80.0
        %v1237 = vmax.f32 %v1109, -80.0
        %v1238 = vmax.f32 %v1110, -80.0
        %v1239 = vmax.f32 %v1111, -80.0
        %v1240 = vmax.f32 %v1112, -80.0
        %v1241 = vmax.f32 %v1113, -80.0
        %v1242 = vmax.f32 %v1114, -80.0
        %v1243 = vmax.f32 %v1115, -80.0
        %v1244 = vmax.f32 %v1116, -80.0
        %v1245 = vmax.f32 %v1117, -80.0
        %v1246 = vmax.f32 %v1118, -80.0
        %v1247 = vmax.f32 %v1119, -80.0
        %v1248 = vmax.f32 %v1120, -80.0
        %v1249 = vmax.f32 %v1121, -80.0
        %v1250 = vmax.f32 %v1122, -80.0
        %v1251 = vmax.f32 %v1123, -80.0
        %v1252 = vmul.f32 %v1124, 1.442695
        %v1253 = vpow.pop %v1252
        %v1254 = vmul.f32 %v1125, 1.442695
        %v1255 = vpow.pop %v1254
        %v1256 = vmul.f32 %v1126, 1.442695
        %v1257 = vpow.pop %v1256
        %v1258 = vmul.f32 %v1127, 1.442695
        %v1259 = vpow.pop %v1258
        %v1260 = vmul.f32 %v1128, 1.442695
        %v1261 = vpow.pop %v1260
        %v1262 = vmul.f32 %v1129, 1.442695
        %v1263 = vpow.pop %v1262
        %v1264 = vmul.f32 %v1130, 1.442695
        %v1265 = vpow.pop %v1264
        %v1266 = vmul.f32 %v1131, 1.442695
        %v1267 = vpow.pop %v1266
        %v1268 = vmul.f32 %v1132, 1.442695
        %v1269 = vpow.pop %v1268
        %v1270 = vmul.f32 %v1133, 1.442695
        %v1271 = vpow.pop %v1270
        %v1272 = vmul.f32 %v1134, 1.442695
        %v1273 = vpow.pop %v1272
        %v1274 = vmul.f32 %v1135, 1.442695
        %v1275 = vpow.pop %v1274
        %v1276 = vmul.f32 %v1136, 1.442695
        %v1277 = vpow.pop %v1276
        %v1278 = vmul.f32 %v1137, 1.442695
        %v1279 = vpow.pop %v1278
        %v1280 = vmul.f32 %v1138, 1.442695
        %v1281 = vpow.pop %v1280
        %v1282 = vmul.f32 %v1139, 1.442695
        %v1283 = vpow.pop %v1282
        %v1284 = vmul.f32 %v1140, 1.442695
        %v1285 = vpow.pop %v1284
        %v1286 = vmul.f32 %v1141, 1.442695
        %v1287 = vpow.pop %v1286
        %v1288 = vmul.f32 %v1142, 1.442695
        %v1289 = vpow.pop %v1288
        %v1290 = vmul.f32 %v1143, 1.442695
        %v1291 = vpow.pop %v1290
        %v1292 = vmul.f32 %v1144, 1.442695
        %v1293 = vpow.pop %v1292
        %v1294 = vmul.f32 %v1145, 1.442695
        %v1295 = vpow.pop %v1294
        %v1296 = vmul.f32 %v1146, 1.442695
        %v1297 = vpow.pop %v1296
        %v1298 = vmul.f32 %v1147, 1.442695
        %v1299 = vpow.pop %v1298
        %v1300 = vmul.f32 %v1148, 1.442695
        %v1301 = vpow.pop %v1300
        %v1302 = vmul.f32 %v1149, 1.442695
        %v1303 = vpow.pop %v1302
        %v1304 = vmul.f32 %v1150, 1.442695
        %v1305 = vpow.pop %v1304
        %v1306 = vmul.f32 %v1151, 1.442695
        %v1307 = vpow.pop %v1306
        %v1308 = vmul.f32 %v1152, 1.442695
        %v1309 = vpow.pop %v1308
        %v1310 = vmul.f32 %v1153, 1.442695
        %v1311 = vpow.pop %v1310
        %v1312 = vmul.f32 %v1154, 1.442695
        %v1313 = vpow.pop %v1312
        %v1314 = vmul.f32 %v1155, 1.442695
        %v1315 = vpow.pop %v1314
        %v1316 = vmul.f32 %v1156, 1.442695
        %v1317 = vpow.pop %v1316
        %v1318 = vmul.f32 %v1157, 1.442695
        %v1319 = vpow.pop %v1318
        %v1320 = vmul.f32 %v1158, 1.442695
        %v1321 = vpow.pop %v1320
        %v1322 = vmul.f32 %v1159, 1.442695
        %v1323 = vpow.pop %v1322
        %v1324 = vmul.f32 %v1160, 1.442695
        %v1325 = vpow.pop %v1324
        %v1326 = vmul.f32 %v1161, 1.442695
        %v1327 = vpow.pop %v1326
        %v1328 = vmul.f32 %v1162, 1.442695
        %v1329 = vpow.pop %v1328
        %v1330 = vmul.f32 %v1163, 1.442695
        %v1331 = vpow.pop %v1330
        %v1332 = vmul.f32 %v1164, 1.442695
        %v1333 = vpow.pop %v1332
        %v1334 = vmul.f32 %v1165, 1.442695
        %v1335 = vpow.pop %v1334
        %v1336 = vmul.f32 %v1166, 1.442695
        %v1337 = vpow.pop %v1336
        %v1338 = vmul.f32 %v1167, 1.442695
        %v1339 = vpow.pop %v1338
        %v1340 = vmul.f32 %v1168, 1.442695
        %v1341 = vpow.pop %v1340
        %v1342 = vmul.f32 %v1169, 1.442695
        %v1343 = vpow.pop %v1342
        %v1344 = vmul.f32 %v1170, 1.442695
        %v1345 = vpow.pop %v1344
        %v1346 = vmul.f32 %v1171, 1.442695
        %v1347 = vpow.pop %v1346
        %v1348 = vmul.f32 %v1172, 1.442695
        %v1349 = vpow.pop %v1348
        %v1350 = vmul.f32 %v1173, 1.442695
        %v1351 = vpow.pop %v1350
        %v1352 = vmul.f32 %v1174, 1.442695
        %v1353 = vpow.pop %v1352
        %v1354 = vmul.f32 %v1175, 1.442695
        %v1355 = vpow.pop %v1354
        %v1356 = vmul.f32 %v1176, 1.442695
        %v1357 = vpow.pop %v1356
        %v1358 = vmul.f32 %v1177, 1.442695
        %v1359 = vpow.pop %v1358
        %v1360 = vmul.f32 %v1178, 1.442695
        %v1361 = vpow.pop %v1360
        %v1362 = vmul.f32 %v1179, 1.442695
        %v1363 = vpow.pop %v1362
        %v1364 = vmul.f32 %v1180, 1.442695
        %v1365 = vpow.pop %v1364
        %v1366 = vmul.f32 %v1181, 1.442695
        %v1367 = vpow.pop %v1366
        %v1368 = vmul.f32 %v1182, 1.442695
        %v1369 = vpow.pop %v1368
        %v1370 = vmul.f32 %v1183, 1.442695
        %v1371 = vpow.pop %v1370
        %v1372 = vmul.f32 %v1184, 1.442695
        %v1373 = vpow.pop %v1372
        %v1374 = vmul.f32 %v1185, 1.442695
        %v1375 = vpow.pop %v1374
        %v1376 = vmul.f32 %v1186, 1.442695
        %v1377 = vpow.pop %v1376
        %v1378 = vmul.f32 %v1187, 1.442695
        %v1379 = vpow.pop %v1378
        %v1380 = vmul.f32 %v1188, 1.442695
        %v1381 = vpow.pop %v1380
        %v1382 = vmul.f32 %v1189, 1.442695
        %v1383 = vpow.pop %v1382
        %v1384 = vmul.f32 %v1190, 1.442695
        %v1385 = vpow.pop %v1384
        %v1386 = vmul.f32 %v1191, 1.442695
        %v1387 = vpow.pop %v1386
        %v1388 = vmul.f32 %v1192, 1.442695
        %v1389 = vpow.pop %v1388
        %v1390 = vmul.f32 %v1193, 1.442695
        %v1391 = vpow.pop %v1390
        %v1392 = vmul.f32 %v1194, 1.442695
        %v1393 = vpow.pop %v1392
        %v1394 = vmul.f32 %v1195, 1.442695
        %v1395 = vpow.pop %v1394
        %v1396 = vmul.f32 %v1196, 1.442695
        %v1397 = vpow.pop %v1396
        %v1398 = vmul.f32 %v1197, 1.442695
        %v1399 = vpow.pop %v1398
        %v1400 = vmul.f32 %v1198, 1.442695
        %v1401 = vpow.pop %v1400
        %v1402 = vmul.f32 %v1199, 1.442695
        %v1403 = vpow.pop %v1402
        %v1404 = vmul.f32 %v1200, 1.442695
        %v1405 = vpow.pop %v1404
        %v1406 = vmul.f32 %v1201, 1.442695
        %v1407 = vpow.pop %v1406
        %v1408 = vmul.f32 %v1202, 1.442695
        %v1409 = vpow.pop %v1408
        %v1410 = vmul.f32 %v1203, 1.442695
        %v1411 = vpow.pop %v1410
        %v1412 = vmul.f32 %v1204, 1.442695
        %v1413 = vpow.pop %v1412
        %v1414 = vmul.f32 %v1205, 1.442695
        %v1415 = vpow.pop %v1414
        %v1416 = vmul.f32 %v1206, 1.442695
        %v1417 = vpow.pop %v1416
        %v1418 = vmul.f32 %v1207, 1.442695
        %v1419 = vpow.pop %v1418
        %v1420 = vmul.f32 %v1208, 1.442695
        %v1421 = vpow.pop %v1420
        %v1422 = vmul.f32 %v1209, 1.442695
        %v1423 = vpow.pop %v1422
        %v1424 = vmul.f32 %v1210, 1.442695
        %v1425 = vpow.pop %v1424
        %v1426 = vmul.f32 %v1211, 1.442695
        %v1427 = vpow.pop %v1426
        %v1428 = vmul.f32 %v1212, 1.442695
        %v1429 = vpow.pop %v1428
        %v1430 = vmul.f32 %v1213, 1.442695
        %v1431 = vpow.pop %v1430
        %v1432 = vmul.f32 %v1214, 1.442695
        %v1433 = vpow.pop %v1432
        %v1434 = vmul.f32 %v1215, 1.442695
        %v1435 = vpow.pop %v1434
        %v1436 = vmul.f32 %v1216, 1.442695
        %v1437 = vpow.pop %v1436
        %v1438 = vmul.f32 %v1217, 1.442695
        %v1439 = vpow.pop %v1438
        %v1440 = vmul.f32 %v1218, 1.442695
        %v1441 = vpow.pop %v1440
        %v1442 = vmul.f32 %v1219, 1.442695
        %v1443 = vpow.pop %v1442
        %v1444 = vmul.f32 %v1220, 1.442695
        %v1445 = vpow.pop %v1444
        %v1446 = vmul.f32 %v1221, 1.442695
        %v1447 = vpow.pop %v1446
        %v1448 = vmul.f32 %v1222, 1.442695
        %v1449 = vpow.pop %v1448
        %v1450 = vmul.f32 %v1223, 1.442695
        %v1451 = vpow.pop %v1450
        %v1452 = vmul.f32 %v1224, 1.442695
        %v1453 = vpow.pop %v1452
        %v1454 = vmul.f32 %v1225, 1.442695
        %v1455 = vpow.pop %v1454
        %v1456 = vmul.f32 %v1226, 1.442695
        %v1457 = vpow.pop %v1456
        %v1458 = vmul.f32 %v1227, 1.442695
        %v1459 = vpow.pop %v1458
        %v1460 = vmul.f32 %v1228, 1.442695
        %v1461 = vpow.pop %v1460
        %v1462 = vmul.f32 %v1229, 1.442695
        %v1463 = vpow.pop %v1462
        %v1464 = vmul.f32 %v1230, 1.442695
        %v1465 = vpow.pop %v1464
        %v1466 = vmul.f32 %v1231, 1.442695
        %v1467 = vpow.pop %v1466
        %v1468 = vmul.f32 %v1232, 1.442695
        %v1469 = vpow.pop %v1468
        %v1470 = vmul.f32 %v1233, 1.442695
        %v1471 = vpow.pop %v1470
        %v1472 = vmul.f32 %v1234, 1.442695
        %v1473 = vpow.pop %v1472
        %v1474 = vmul.f32 %v1235, 1.442695
        %v1475 = vpow.pop %v1474
        %v1476 = vmul.f32 %v1236, 1.442695
        %v1477 = vpow.pop %v1476
        %v1478 = vmul.f32 %v1237, 1.442695
        %v1479 = vpow.pop %v1478
        %v1480 = vmul.f32 %v1238, 1.442695
        %v1481 = vpow.pop %v1480
        %v1482 = vmul.f32 %v1239, 1.442695
        %v1483 = vpow.pop %v1482
        %v1484 = vmul.f32 %v1240, 1.442695
        %v1485 = vpow.pop %v1484
        %v1486 = vmul.f32 %v1241, 1.442695
        %v1487 = vpow.pop %v1486
        %v1488 = vmul.f32 %v1242, 1.442695
        %v1489 = vpow.pop %v1488
        %v1490 = vmul.f32 %v1243, 1.442695
        %v1491 = vpow.pop %v1490
        %v1492 = vmul.f32 %v1244, 1.442695
        %v1493 = vpow.pop %v1492
        %v1494 = vmul.f32 %v1245, 1.442695
        %v1495 = vpow.pop %v1494
        %v1496 = vmul.f32 %v1246, 1.442695
        %v1497 = vpow.pop %v1496
        %v1498 = vmul.f32 %v1247, 1.442695
        %v1499 = vpow.pop %v1498
        %v1500 = vmul.f32 %v1248, 1.442695
        %v1501 = vpow.pop %v1500
        %v1502 = vmul.f32 %v1249, 1.442695
        %v1503 = vpow.pop %v1502
        %v1504 = vmul.f32 %v1250, 1.442695
        %v1505 = vpow.pop %v1504
        %v1506 = vmul.f32 %v1251, 1.442695
        %v1507 = vpow.pop %v1506
        %v1508 = vpack.c.bf16 %v1257, %v1253
        %v1509 = vpack.c.bf16 %v1259, %v1255
        %v1510 = vpack.c.bf16 %v1265, %v1261
        %v1511 = vpack.c.bf16 %v1267, %v1263
        %v1512 = vpack.c.bf16 %v1273, %v1269
        %v1513 = vpack.c.bf16 %v1275, %v1271
        %v1514 = vpack.c.bf16 %v1281, %v1277
        %v1515 = vpack.c.bf16 %v1283, %v1279
        %v1516 = vpack.c.bf16 %v1289, %v1285
        %v1517 = vpack.c.bf16 %v1291, %v1287
        %v1518 = vpack.c.bf16 %v1297, %v1293
        %v1519 = vpack.c.bf16 %v1299, %v1295
        %v1520 = vpack.c.bf16 %v1305, %v1301
        %v1521 = vpack.c.bf16 %v1307, %v1303
        %v1522 = vpack.c.bf16 %v1313, %v1309
        %v1523 = vpack.c.bf16 %v1315, %v1311
        %v1524 = vpack.c.bf16 %v1321, %v1317
        %v1525 = vpack.c.bf16 %v1323, %v1319
        %v1526 = vpack.c.bf16 %v1329, %v1325
        %v1527 = vpack.c.bf16 %v1331, %v1327
        %v1528 = vpack.c.bf16 %v1337, %v1333
        %v1529 = vpack.c.bf16 %v1339, %v1335
        %v1530 = vpack.c.bf16 %v1345, %v1341
        %v1531 = vpack.c.bf16 %v1347, %v1343
        %v1532 = vpack.c.bf16 %v1353, %v1349
        %v1533 = vpack.c.bf16 %v1355, %v1351
        %v1534 = vpack.c.bf16 %v1361, %v1357
        %v1535 = vpack.c.bf16 %v1363, %v1359
        %v1536 = vpack.c.bf16 %v1369, %v1365
        %v1537 = vpack.c.bf16 %v1371, %v1367
        %v1538 = vpack.c.bf16 %v1377, %v1373
        %v1539 = vpack.c.bf16 %v1379, %v1375
        %v1540 = vpack.c.bf16 %v1385, %v1381
        %v1541 = vpack.c.bf16 %v1387, %v1383
        %v1542 = vpack.c.bf16 %v1393, %v1389
        %v1543 = vpack.c.bf16 %v1395, %v1391
        %v1544 = vpack.c.bf16 %v1401, %v1397
        %v1545 = vpack.c.bf16 %v1403, %v1399
        %v1546 = vpack.c.bf16 %v1409, %v1405
        %v1547 = vpack.c.bf16 %v1411, %v1407
        %v1548 = vpack.c.bf16 %v1417, %v1413
        %v1549 = vpack.c.bf16 %v1419, %v1415
        %v1550 = vpack.c.bf16 %v1425, %v1421
        %v1551 = vpack.c.bf16 %v1427, %v1423
        %v1552 = vpack.c.bf16 %v1433, %v1429
        %v1553 = vpack.c.bf16 %v1435, %v1431
        %v1554 = vpack.c.bf16 %v1441, %v1437
        %v1555 = vpack.c.bf16 %v1443, %v1439
        %v1556 = vpack.c.bf16 %v1449, %v1445
        %v1557 = vpack.c.bf16 %v1451, %v1447
        %v1558 = vpack.c.bf16 %v1457, %v1453
        %v1559 = vpack.c.bf16 %v1459, %v1455
        %v1560 = vpack.c.bf16 %v1465, %v1461
        %v1561 = vpack.c.bf16 %v1467, %v1463
        %v1562 = vpack.c.bf16 %v1473, %v1469
        %v1563 = vpack.c.bf16 %v1475, %v1471
        %v1564 = vpack.c.bf16 %v1481, %v1477
        %v1565 = vpack.c.bf16 %v1483, %v1479
        %v1566 = vpack.c.bf16 %v1489, %v1485
        %v1567 = vpack.c.bf16 %v1491, %v1487
        %v1568 = vpack.c.bf16 %v1497, %v1493
        %v1569 = vpack.c.bf16 %v1499, %v1495
        %v1570 = vpack.c.bf16 %v1505, %v1501
        %v1571 = vpack.c.bf16 %v1507, %v1503
        %v1572 = vld [vmem:[#allocation8] sm:$0xff]
        %v1573 = vld [vmem:[#allocation8 + $0x8] sm:$0xff]
        %v1574 = vld [vmem:[#allocation8 + $0x10] sm:$0xff]
        %v1575 = vld [vmem:[#allocation8 + $0x18] sm:$0xff]
        %v1576 = vld [vmem:[#allocation8 + $0x20] sm:$0xff]
        %v1577 = vld [vmem:[#allocation8 + $0x28] sm:$0xff]
        %v1578 = vld [vmem:[#allocation8 + $0x30] sm:$0xff]
        %v1579 = vld [vmem:[#allocation8 + $0x38] sm:$0xff]
        %v1580 = vld [vmem:[#allocation8 + $0x40] sm:$0xff]
        %v1581 = vld [vmem:[#allocation8 + $0x48] sm:$0xff]
        %v1582 = vld [vmem:[#allocation8 + $0x50] sm:$0xff]
        %v1583 = vld [vmem:[#allocation8 + $0x58] sm:$0xff]
        %v1584 = vld [vmem:[#allocation8 + $0x60] sm:$0xff]
        %v1585 = vld [vmem:[#allocation8 + $0x68] sm:$0xff]
        %v1586 = vld [vmem:[#allocation8 + $0x70] sm:$0xff]
        %v1587 = vld [vmem:[#allocation8 + $0x78] sm:$0xff]
        %v1588 = vld [vmem:[#allocation8 + $0x80] sm:$0xff]
        %v1589 = vld [vmem:[#allocation8 + $0x88] sm:$0xff]
        %v1590 = vld [vmem:[#allocation8 + $0x90] sm:$0xff]
        %v1591 = vld [vmem:[#allocation8 + $0x98] sm:$0xff]
        %v1592 = vld [vmem:[#allocation8 + $0xa0] sm:$0xff]
        %v1593 = vld [vmem:[#allocation8 + $0xa8] sm:$0xff]
        %v1594 = vld [vmem:[#allocation8 + $0xb0] sm:$0xff]
        %v1595 = vld [vmem:[#allocation8 + $0xb8] sm:$0xff]
        %v1596 = vld [vmem:[#allocation8 + $0xc0] sm:$0xff]
        %v1597 = vld [vmem:[#allocation8 + $0xc8] sm:$0xff]
        %v1598 = vld [vmem:[#allocation8 + $0xd0] sm:$0xff]
        %v1599 = vld [vmem:[#allocation8 + $0xd8] sm:$0xff]
        %v1600 = vld [vmem:[#allocation8 + $0xe0] sm:$0xff]
        %v1601 = vld [vmem:[#allocation8 + $0xe8] sm:$0xff]
        %v1602 = vld [vmem:[#allocation8 + $0xf0] sm:$0xff]
        %v1603 = vld [vmem:[#allocation8 + $0xf8] sm:$0xff]
        %v1636 = vunpack.c.l.b16 %v1572
        %v1637 = vunpack.c.h.b16 %v1572
        %v1638 = vunpack.c.l.b16 %v1573
        %v1639 = vunpack.c.h.b16 %v1573
        %v1640 = vunpack.c.l.b16 %v1574
        %v1641 = vunpack.c.h.b16 %v1574
        %v1642 = vunpack.c.l.b16 %v1575
        %v1643 = vunpack.c.h.b16 %v1575
        %v1644 = vunpack.c.l.b16 %v1576
        %v1645 = vunpack.c.h.b16 %v1576
        %v1646 = vunpack.c.l.b16 %v1577
        %v1647 = vunpack.c.h.b16 %v1577
        %v1648 = vunpack.c.l.b16 %v1578
        %v1649 = vunpack.c.h.b16 %v1578
        %v1650 = vunpack.c.l.b16 %v1579
        %v1651 = vunpack.c.h.b16 %v1579
        %v1652 = vunpack.c.l.b16 %v1580
        %v1653 = vunpack.c.h.b16 %v1580
        %v1654 = vunpack.c.l.b16 %v1581
        %v1655 = vunpack.c.h.b16 %v1581
        %v1656 = vunpack.c.l.b16 %v1582
        %v1657 = vunpack.c.h.b16 %v1582
        %v1658 = vunpack.c.l.b16 %v1583
        %v1659 = vunpack.c.h.b16 %v1583
        %v1660 = vunpack.c.l.b16 %v1584
        %v1661 = vunpack.c.h.b16 %v1584
        %v1662 = vunpack.c.l.b16 %v1585
        %v1663 = vunpack.c.h.b16 %v1585
        %v1664 = vunpack.c.l.b16 %v1586
        %v1665 = vunpack.c.h.b16 %v1586
        %v1666 = vunpack.c.l.b16 %v1587
        %v1667 = vunpack.c.h.b16 %v1587
        %v1668 = vunpack.c.l.b16 %v1588
        %v1669 = vunpack.c.h.b16 %v1588
        %v1670 = vunpack.c.l.b16 %v1589
        %v1671 = vunpack.c.h.b16 %v1589
        %v1672 = vunpack.c.l.b16 %v1590
        %v1673 = vunpack.c.h.b16 %v1590
        %v1674 = vunpack.c.l.b16 %v1591
        %v1675 = vunpack.c.h.b16 %v1591
        %v1676 = vunpack.c.l.b16 %v1592
        %v1677 = vunpack.c.h.b16 %v1592
        %v1678 = vunpack.c.l.b16 %v1593
        %v1679 = vunpack.c.h.b16 %v1593
        %v1680 = vunpack.c.l.b16 %v1594
        %v1681 = vunpack.c.h.b16 %v1594
        %v1682 = vunpack.c.l.b16 %v1595
        %v1683 = vunpack.c.h.b16 %v1595
        %v1684 = vunpack.c.l.b16 %v1596
        %v1685 = vunpack.c.h.b16 %v1596
        %v1686 = vunpack.c.l.b16 %v1597
        %v1687 = vunpack.c.h.b16 %v1597
        %v1688 = vunpack.c.l.b16 %v1598
        %v1689 = vunpack.c.h.b16 %v1598
        %v1690 = vunpack.c.l.b16 %v1599
        %v1691 = vunpack.c.h.b16 %v1599
        %v1692 = vunpack.c.l.b16 %v1600
        %v1693 = vunpack.c.h.b16 %v1600
        %v1694 = vunpack.c.l.b16 %v1601
        %v1695 = vunpack.c.h.b16 %v1601
        %v1696 = vunpack.c.l.b16 %v1602
        %v1697 = vunpack.c.h.b16 %v1602
        %v1698 = vunpack.c.l.b16 %v1603
        %v1699 = vunpack.c.h.b16 %v1603
        %v1700 = vpack.c.b16 %v1638, %v1636
        %v1701 = vpack.c.b16 %v1639, %v1637
        %v1702 = vpack.c.b16 %v1642, %v1640
        %v1703 = vpack.c.b16 %v1643, %v1641
        %v1704 = vpack.c.b16 %v1646, %v1644
        %v1705 = vpack.c.b16 %v1647, %v1645
        %v1706 = vpack.c.b16 %v1650, %v1648
        %v1707 = vpack.c.b16 %v1651, %v1649
        %v1708 = vpack.c.b16 %v1654, %v1652
        %v1709 = vpack.c.b16 %v1655, %v1653
        %v1710 = vpack.c.b16 %v1658, %v1656
        %v1711 = vpack.c.b16 %v1659, %v1657
        %v1712 = vpack.c.b16 %v1662, %v1660
        %v1713 = vpack.c.b16 %v1663, %v1661
        %v1714 = vpack.c.b16 %v1666, %v1664
        %v1715 = vpack.c.b16 %v1667, %v1665
        %v1716 = vpack.c.b16 %v1670, %v1668
        %v1717 = vpack.c.b16 %v1671, %v1669
        %v1718 = vpack.c.b16 %v1674, %v1672
        %v1719 = vpack.c.b16 %v1675, %v1673
        %v1720 = vpack.c.b16 %v1678, %v1676
        %v1721 = vpack.c.b16 %v1679, %v1677
        %v1722 = vpack.c.b16 %v1682, %v1680
        %v1723 = vpack.c.b16 %v1683, %v1681
        %v1724 = vpack.c.b16 %v1686, %v1684
        %v1725 = vpack.c.b16 %v1687, %v1685
        %v1726 = vpack.c.b16 %v1690, %v1688
        %v1727 = vpack.c.b16 %v1691, %v1689
        %v1728 = vpack.c.b16 %v1694, %v1692
        %v1729 = vpack.c.b16 %v1695, %v1693
        %v1730 = vpack.c.b16 %v1698, %v1696
        %v1731 = vpack.c.b16 %v1699, %v1697
        %1764 = vmatpush.bf16.msra.mxu0 %v1714
        %1765 = vmatpush.bf16.msra.mxu0 %v1712
        %1766 = vmatpush.bf16.msra.mxu0 %v1710
        %1767 = vmatpush.bf16.msra.mxu0 %v1708
        %1768 = vmatpush.bf16.msra.mxu0 %v1706
        %1769 = vmatpush.bf16.msra.mxu0 %v1704
        %1770 = vmatpush.bf16.msra.mxu0 %v1702
        %1771 = vmatpush.bf16.msra.mxu0 %v1700
        %1772 = vmatmul.bf16.gmra.mxu0 %v1508
        %v1773 = vpop.f32.mrf.mxu0
        %v1774 = vadd.f32 0.0, %v1773
        %v1775 = vpop.f32.mrf.mxu0
        %v1776 = vadd.f32 0.0, %v1775
        %1777 = vmatmul.bf16.gmra.mxu0 %v1510
        %v1778 = vpop.f32.mrf.mxu0
        %v1779 = vadd.f32 0.0, %v1778
        %v1780 = vpop.f32.mrf.mxu0
        %v1781 = vadd.f32 0.0, %v1780
        %1782 = vmatmul.bf16.gmra.mxu0 %v1512
        %v1783 = vpop.f32.mrf.mxu0
        %v1784 = vadd.f32 0.0, %v1783
        %v1785 = vpop.f32.mrf.mxu0
        %v1786 = vadd.f32 0.0, %v1785
        %1787 = vmatmul.bf16.gmra.mxu0 %v1514
        %v1788 = vpop.f32.mrf.mxu0
        %v1789 = vadd.f32 0.0, %v1788
        %v1790 = vpop.f32.mrf.mxu0
        %v1791 = vadd.f32 0.0, %v1790
        %1792 = vmatmul.bf16.gmra.mxu0 %v1516
        %v1793 = vpop.f32.mrf.mxu0
        %v1794 = vadd.f32 0.0, %v1793
        %v1795 = vpop.f32.mrf.mxu0
        %v1796 = vadd.f32 0.0, %v1795
        %1797 = vmatmul.bf16.gmra.mxu0 %v1518
        %v1798 = vpop.f32.mrf.mxu0
        %v1799 = vadd.f32 0.0, %v1798
        %v1800 = vpop.f32.mrf.mxu0
        %v1801 = vadd.f32 0.0, %v1800
        %1802 = vmatmul.bf16.gmra.mxu0 %v1520
        %v1803 = vpop.f32.mrf.mxu0
        %v1804 = vadd.f32 0.0, %v1803
        %v1805 = vpop.f32.mrf.mxu0
        %v1806 = vadd.f32 0.0, %v1805
        %1807 = vmatmul.bf16.gmra.mxu0 %v1522
        %v1808 = vpop.f32.mrf.mxu0
        %v1809 = vadd.f32 0.0, %v1808
        %v1810 = vpop.f32.mrf.mxu0
        %v1811 = vadd.f32 0.0, %v1810
        %1812 = vmatmul.bf16.gmra.mxu0 %v1524
        %v1813 = vpop.f32.mrf.mxu0
        %v1814 = vadd.f32 0.0, %v1813
        %v1815 = vpop.f32.mrf.mxu0
        %v1816 = vadd.f32 0.0, %v1815
        %1817 = vmatmul.bf16.gmra.mxu0 %v1526
        %v1818 = vpop.f32.mrf.mxu0
        %v1819 = vadd.f32 0.0, %v1818
        %v1820 = vpop.f32.mrf.mxu0
        %v1821 = vadd.f32 0.0, %v1820
        %1822 = vmatmul.bf16.gmra.mxu0 %v1528
        %v1823 = vpop.f32.mrf.mxu0
        %v1824 = vadd.f32 0.0, %v1823
        %v1825 = vpop.f32.mrf.mxu0
        %v1826 = vadd.f32 0.0, %v1825
        %1827 = vmatmul.bf16.gmra.mxu0 %v1530
        %v1828 = vpop.f32.mrf.mxu0
        %v1829 = vadd.f32 0.0, %v1828
        %v1830 = vpop.f32.mrf.mxu0
        %v1831 = vadd.f32 0.0, %v1830
        %1832 = vmatmul.bf16.gmra.mxu0 %v1532
        %v1833 = vpop.f32.mrf.mxu0
        %v1834 = vadd.f32 0.0, %v1833
        %v1835 = vpop.f32.mrf.mxu0
        %v1836 = vadd.f32 0.0, %v1835
        %1837 = vmatmul.bf16.gmra.mxu0 %v1534
        %v1838 = vpop.f32.mrf.mxu0
        %v1839 = vadd.f32 0.0, %v1838
        %v1840 = vpop.f32.mrf.mxu0
        %v1841 = vadd.f32 0.0, %v1840
        %1842 = vmatmul.bf16.gmra.mxu0 %v1536
        %v1843 = vpop.f32.mrf.mxu0
        %v1844 = vadd.f32 0.0, %v1843
        %v1845 = vpop.f32.mrf.mxu0
        %v1846 = vadd.f32 0.0, %v1845
        %1847 = vmatmul.bf16.gmra.mxu0 %v1538
        %v1848 = vpop.f32.mrf.mxu0
        %v1849 = vadd.f32 0.0, %v1848
        %v1850 = vpop.f32.mrf.mxu0
        %v1851 = vadd.f32 0.0, %v1850
        %1852 = vmatmul.bf16.gmra.mxu0 %v1540
        %v1853 = vpop.f32.mrf.mxu0
        %v1854 = vadd.f32 0.0, %v1853
        %v1855 = vpop.f32.mrf.mxu0
        %v1856 = vadd.f32 0.0, %v1855
        %1857 = vmatmul.bf16.gmra.mxu0 %v1542
        %v1858 = vpop.f32.mrf.mxu0
        %v1859 = vadd.f32 0.0, %v1858
        %v1860 = vpop.f32.mrf.mxu0
        %v1861 = vadd.f32 0.0, %v1860
        %1862 = vmatmul.bf16.gmra.mxu0 %v1544
        %v1863 = vpop.f32.mrf.mxu0
        %v1864 = vadd.f32 0.0, %v1863
        %v1865 = vpop.f32.mrf.mxu0
        %v1866 = vadd.f32 0.0, %v1865
        %1867 = vmatmul.bf16.gmra.mxu0 %v1546
        %v1868 = vpop.f32.mrf.mxu0
        %v1869 = vadd.f32 0.0, %v1868
        %v1870 = vpop.f32.mrf.mxu0
        %v1871 = vadd.f32 0.0, %v1870
        %1872 = vmatmul.bf16.gmra.mxu0 %v1548
        %v1873 = vpop.f32.mrf.mxu0
        %v1874 = vadd.f32 0.0, %v1873
        %v1875 = vpop.f32.mrf.mxu0
        %v1876 = vadd.f32 0.0, %v1875
        %1877 = vmatmul.bf16.gmra.mxu0 %v1550
        %v1878 = vpop.f32.mrf.mxu0
        %v1879 = vadd.f32 0.0, %v1878
        %v1880 = vpop.f32.mrf.mxu0
        %v1881 = vadd.f32 0.0, %v1880
        %1882 = vmatmul.bf16.gmra.mxu0 %v1552
        %v1883 = vpop.f32.mrf.mxu0
        %v1884 = vadd.f32 0.0, %v1883
        %v1885 = vpop.f32.mrf.mxu0
        %v1886 = vadd.f32 0.0, %v1885
        %1887 = vmatmul.bf16.gmra.mxu0 %v1554
        %v1888 = vpop.f32.mrf.mxu0
        %v1889 = vadd.f32 0.0, %v1888
        %v1890 = vpop.f32.mrf.mxu0
        %v1891 = vadd.f32 0.0, %v1890
        %1892 = vmatmul.bf16.gmra.mxu0 %v1556
        %v1893 = vpop.f32.mrf.mxu0
        %v1894 = vadd.f32 0.0, %v1893
        %v1895 = vpop.f32.mrf.mxu0
        %v1896 = vadd.f32 0.0, %v1895
        %1897 = vmatmul.bf16.gmra.mxu0 %v1558
        %v1898 = vpop.f32.mrf.mxu0
        %v1899 = vadd.f32 0.0, %v1898
        %v1900 = vpop.f32.mrf.mxu0
        %v1901 = vadd.f32 0.0, %v1900
        %1902 = vmatmul.bf16.gmra.mxu0 %v1560
        %v1903 = vpop.f32.mrf.mxu0
        %v1904 = vadd.f32 0.0, %v1903
        %v1905 = vpop.f32.mrf.mxu0
        %v1906 = vadd.f32 0.0, %v1905
        %1907 = vmatmul.bf16.gmra.mxu0 %v1562
        %v1908 = vpop.f32.mrf.mxu0
        %v1909 = vadd.f32 0.0, %v1908
        %v1910 = vpop.f32.mrf.mxu0
        %v1911 = vadd.f32 0.0, %v1910
        %1912 = vmatmul.bf16.gmra.mxu0 %v1564
        %v1913 = vpop.f32.mrf.mxu0
        %v1914 = vadd.f32 0.0, %v1913
        %v1915 = vpop.f32.mrf.mxu0
        %v1916 = vadd.f32 0.0, %v1915
        %1917 = vmatmul.bf16.gmra.mxu0 %v1566
        %v1918 = vpop.f32.mrf.mxu0
        %v1919 = vadd.f32 0.0, %v1918
        %v1920 = vpop.f32.mrf.mxu0
        %v1921 = vadd.f32 0.0, %v1920
        %1922 = vmatmul.bf16.gmra.mxu0 %v1568
        %v1923 = vpop.f32.mrf.mxu0
        %v1924 = vadd.f32 0.0, %v1923
        %v1925 = vpop.f32.mrf.mxu0
        %v1926 = vadd.f32 0.0, %v1925
        %1927 = vmatmul.bf16.gmra.mxu0 %v1570
        %v1928 = vpop.f32.mrf.mxu0
        %v1929 = vadd.f32 0.0, %v1928
        %v1930 = vpop.f32.mrf.mxu0
        %v1931 = vadd.f32 0.0, %v1930
        %1932 = vdwg.mxu0
        %1933 = vmatpush.bf16.msra.mxu0 %v1730
        %1934 = vmatpush.bf16.msra.mxu0 %v1728
        %1935 = vmatpush.bf16.msra.mxu0 %v1726
        %1936 = vmatpush.bf16.msra.mxu0 %v1724
        %1937 = vmatpush.bf16.msra.mxu0 %v1722
        %1938 = vmatpush.bf16.msra.mxu0 %v1720
        %1939 = vmatpush.bf16.msra.mxu0 %v1718
        %1940 = vmatpush.bf16.msra.mxu0 %v1716
        %1941 = vmatmul.bf16.gmra.mxu0 %v1509
        %v1942 = vpop.f32.mrf.mxu0
        %v1943 = vadd.f32 %v1774, %v1942
        %v1944 = vpop.f32.mrf.mxu0
        %v1945 = vadd.f32 %v1776, %v1944
        %1946 = vmatmul.bf16.gmra.mxu0 %v1511
        %v1947 = vpop.f32.mrf.mxu0
        %v1948 = vadd.f32 %v1779, %v1947
        %v1949 = vpop.f32.mrf.mxu0
        %v1950 = vadd.f32 %v1781, %v1949
        %1951 = vmatmul.bf16.gmra.mxu0 %v1513
        %v1952 = vpop.f32.mrf.mxu0
        %v1953 = vadd.f32 %v1784, %v1952
        %v1954 = vpop.f32.mrf.mxu0
        %v1955 = vadd.f32 %v1786, %v1954
        %1956 = vmatmul.bf16.gmra.mxu0 %v1515
        %v1957 = vpop.f32.mrf.mxu0
        %v1958 = vadd.f32 %v1789, %v1957
        %v1959 = vpop.f32.mrf.mxu0
        %v1960 = vadd.f32 %v1791, %v1959
        %1961 = vmatmul.bf16.gmra.mxu0 %v1517
        %v1962 = vpop.f32.mrf.mxu0
        %v1963 = vadd.f32 %v1794, %v1962
        %v1964 = vpop.f32.mrf.mxu0
        %v1965 = vadd.f32 %v1796, %v1964
        %1966 = vmatmul.bf16.gmra.mxu0 %v1519
        %v1967 = vpop.f32.mrf.mxu0
        %v1968 = vadd.f32 %v1799, %v1967
        %v1969 = vpop.f32.mrf.mxu0
        %v1970 = vadd.f32 %v1801, %v1969
        %1971 = vmatmul.bf16.gmra.mxu0 %v1521
        %v1972 = vpop.f32.mrf.mxu0
        %v1973 = vadd.f32 %v1804, %v1972
        %v1974 = vpop.f32.mrf.mxu0
        %v1975 = vadd.f32 %v1806, %v1974
        %1976 = vmatmul.bf16.gmra.mxu0 %v1523
        %v1977 = vpop.f32.mrf.mxu0
        %v1978 = vadd.f32 %v1809, %v1977
        %v1979 = vpop.f32.mrf.mxu0
        %v1980 = vadd.f32 %v1811, %v1979
        %1981 = vmatmul.bf16.gmra.mxu0 %v1525
        %v1982 = vpop.f32.mrf.mxu0
        %v1983 = vadd.f32 %v1814, %v1982
        %v1984 = vpop.f32.mrf.mxu0
        %v1985 = vadd.f32 %v1816, %v1984
        %1986 = vmatmul.bf16.gmra.mxu0 %v1527
        %v1987 = vpop.f32.mrf.mxu0
        %v1988 = vadd.f32 %v1819, %v1987
        %v1989 = vpop.f32.mrf.mxu0
        %v1990 = vadd.f32 %v1821, %v1989
        %1991 = vmatmul.bf16.gmra.mxu0 %v1529
        %v1992 = vpop.f32.mrf.mxu0
        %v1993 = vadd.f32 %v1824, %v1992
        %v1994 = vpop.f32.mrf.mxu0
        %v1995 = vadd.f32 %v1826, %v1994
        %1996 = vmatmul.bf16.gmra.mxu0 %v1531
        %v1997 = vpop.f32.mrf.mxu0
        %v1998 = vadd.f32 %v1829, %v1997
        %v1999 = vpop.f32.mrf.mxu0
        %v2000 = vadd.f32 %v1831, %v1999
        %2001 = vmatmul.bf16.gmra.mxu0 %v1533
        %v2002 = vpop.f32.mrf.mxu0
        %v2003 = vadd.f32 %v1834, %v2002
        %v2004 = vpop.f32.mrf.mxu0
        %v2005 = vadd.f32 %v1836, %v2004
        %2006 = vmatmul.bf16.gmra.mxu0 %v1535
        %v2007 = vpop.f32.mrf.mxu0
        %v2008 = vadd.f32 %v1839, %v2007
        %v2009 = vpop.f32.mrf.mxu0
        %v2010 = vadd.f32 %v1841, %v2009
        %2011 = vmatmul.bf16.gmra.mxu0 %v1537
        %v2012 = vpop.f32.mrf.mxu0
        %v2013 = vadd.f32 %v1844, %v2012
        %v2014 = vpop.f32.mrf.mxu0
        %v2015 = vadd.f32 %v1846, %v2014
        %2016 = vmatmul.bf16.gmra.mxu0 %v1539
        %v2017 = vpop.f32.mrf.mxu0
        %v2018 = vadd.f32 %v1849, %v2017
        %v2019 = vpop.f32.mrf.mxu0
        %v2020 = vadd.f32 %v1851, %v2019
        %2021 = vmatmul.bf16.gmra.mxu0 %v1541
        %v2022 = vpop.f32.mrf.mxu0
        %v2023 = vadd.f32 %v1854, %v2022
        %v2024 = vpop.f32.mrf.mxu0
        %v2025 = vadd.f32 %v1856, %v2024
        %2026 = vmatmul.bf16.gmra.mxu0 %v1543
        %v2027 = vpop.f32.mrf.mxu0
        %v2028 = vadd.f32 %v1859, %v2027
        %v2029 = vpop.f32.mrf.mxu0
        %v2030 = vadd.f32 %v1861, %v2029
        %2031 = vmatmul.bf16.gmra.mxu0 %v1545
        %v2032 = vpop.f32.mrf.mxu0
        %v2033 = vadd.f32 %v1864, %v2032
        %v2034 = vpop.f32.mrf.mxu0
        %v2035 = vadd.f32 %v1866, %v2034
        %2036 = vmatmul.bf16.gmra.mxu0 %v1547
        %v2037 = vpop.f32.mrf.mxu0
        %v2038 = vadd.f32 %v1869, %v2037
        %v2039 = vpop.f32.mrf.mxu0
        %v2040 = vadd.f32 %v1871, %v2039
        %2041 = vmatmul.bf16.gmra.mxu0 %v1549
        %v2042 = vpop.f32.mrf.mxu0
        %v2043 = vadd.f32 %v1874, %v2042
        %v2044 = vpop.f32.mrf.mxu0
        %v2045 = vadd.f32 %v1876, %v2044
        %2046 = vmatmul.bf16.gmra.mxu0 %v1551
        %v2047 = vpop.f32.mrf.mxu0
        %v2048 = vadd.f32 %v1879, %v2047
        %v2049 = vpop.f32.mrf.mxu0
        %v2050 = vadd.f32 %v1881, %v2049
        %2051 = vmatmul.bf16.gmra.mxu0 %v1553
        %v2052 = vpop.f32.mrf.mxu0
        %v2053 = vadd.f32 %v1884, %v2052
        %v2054 = vpop.f32.mrf.mxu0
        %v2055 = vadd.f32 %v1886, %v2054
        %2056 = vmatmul.bf16.gmra.mxu0 %v1555
        %v2057 = vpop.f32.mrf.mxu0
        %v2058 = vadd.f32 %v1889, %v2057
        %v2059 = vpop.f32.mrf.mxu0
        %v2060 = vadd.f32 %v1891, %v2059
        %2061 = vmatmul.bf16.gmra.mxu0 %v1557
        %v2062 = vpop.f32.mrf.mxu0
        %v2063 = vadd.f32 %v1894, %v2062
        %v2064 = vpop.f32.mrf.mxu0
        %v2065 = vadd.f32 %v1896, %v2064
        %2066 = vmatmul.bf16.gmra.mxu0 %v1559
        %v2067 = vpop.f32.mrf.mxu0
        %v2068 = vadd.f32 %v1899, %v2067
        %v2069 = vpop.f32.mrf.mxu0
        %v2070 = vadd.f32 %v1901, %v2069
        %2071 = vmatmul.bf16.gmra.mxu0 %v1561
        %v2072 = vpop.f32.mrf.mxu0
        %v2073 = vadd.f32 %v1904, %v2072
        %v2074 = vpop.f32.mrf.mxu0
        %v2075 = vadd.f32 %v1906, %v2074
        %2076 = vmatmul.bf16.gmra.mxu0 %v1563
        %v2077 = vpop.f32.mrf.mxu0
        %v2078 = vadd.f32 %v1909, %v2077
        %v2079 = vpop.f32.mrf.mxu0
        %v2080 = vadd.f32 %v1911, %v2079
        %2081 = vmatmul.bf16.gmra.mxu0 %v1565
        %v2082 = vpop.f32.mrf.mxu0
        %v2083 = vadd.f32 %v1914, %v2082
        %v2084 = vpop.f32.mrf.mxu0
        %v2085 = vadd.f32 %v1916, %v2084
        %2086 = vmatmul.bf16.gmra.mxu0 %v1567
        %v2087 = vpop.f32.mrf.mxu0
        %v2088 = vadd.f32 %v1919, %v2087
        %v2089 = vpop.f32.mrf.mxu0
        %v2090 = vadd.f32 %v1921, %v2089
        %2091 = vmatmul.bf16.gmra.mxu0 %v1569
        %v2092 = vpop.f32.mrf.mxu0
        %v2093 = vadd.f32 %v1924, %v2092
        %v2094 = vpop.f32.mrf.mxu0
        %v2095 = vadd.f32 %v1926, %v2094
        %2096 = vmatmul.bf16.gmra.mxu0 %v1571
        %v2097 = vpop.f32.mrf.mxu0
        %v2098 = vadd.f32 %v1929, %v2097
        %v2099 = vpop.f32.mrf.mxu0
        %v2100 = vadd.f32 %v1931, %v2099
        %2101 = vdwg.mxu0
        %2102 = vmatpush.bf16.msra.mxu0 %v1715
        %2103 = vmatpush.bf16.msra.mxu0 %v1713
        %2104 = vmatpush.bf16.msra.mxu0 %v1711
        %2105 = vmatpush.bf16.msra.mxu0 %v1709
        %2106 = vmatpush.bf16.msra.mxu0 %v1707
        %2107 = vmatpush.bf16.msra.mxu0 %v1705
        %2108 = vmatpush.bf16.msra.mxu0 %v1703
        %2109 = vmatpush.bf16.msra.mxu0 %v1701
        %2110 = vmatmul.bf16.gmra.mxu0 %v1508
        %v2111 = vpop.f32.mrf.mxu0
        %v2112 = vadd.f32 0.0, %v2111
        %v2113 = vpop.f32.mrf.mxu0
        %v2114 = vadd.f32 0.0, %v2113
        %2115 = vmatmul.bf16.gmra.mxu0 %v1510
        %v2116 = vpop.f32.mrf.mxu0
        %v2117 = vadd.f32 0.0, %v2116
        %v2118 = vpop.f32.mrf.mxu0
        %v2119 = vadd.f32 0.0, %v2118
        %2120 = vmatmul.bf16.gmra.mxu0 %v1512
        %v2121 = vpop.f32.mrf.mxu0
        %v2122 = vadd.f32 0.0, %v2121
        %v2123 = vpop.f32.mrf.mxu0
        %v2124 = vadd.f32 0.0, %v2123
        %2125 = vmatmul.bf16.gmra.mxu0 %v1514
        %v2126 = vpop.f32.mrf.mxu0
        %v2127 = vadd.f32 0.0, %v2126
        %v2128 = vpop.f32.mrf.mxu0
        %v2129 = vadd.f32 0.0, %v2128
        %2130 = vmatmul.bf16.gmra.mxu0 %v1516
        %v2131 = vpop.f32.mrf.mxu0
        %v2132 = vadd.f32 0.0, %v2131
        %v2133 = vpop.f32.mrf.mxu0
        %v2134 = vadd.f32 0.0, %v2133
        %2135 = vmatmul.bf16.gmra.mxu0 %v1518
        %v2136 = vpop.f32.mrf.mxu0
        %v2137 = vadd.f32 0.0, %v2136
        %v2138 = vpop.f32.mrf.mxu0
        %v2139 = vadd.f32 0.0, %v2138
        %2140 = vmatmul.bf16.gmra.mxu0 %v1520
        %v2141 = vpop.f32.mrf.mxu0
        %v2142 = vadd.f32 0.0, %v2141
        %v2143 = vpop.f32.mrf.mxu0
        %v2144 = vadd.f32 0.0, %v2143
        %2145 = vmatmul.bf16.gmra.mxu0 %v1522
        %v2146 = vpop.f32.mrf.mxu0
        %v2147 = vadd.f32 0.0, %v2146
        %v2148 = vpop.f32.mrf.mxu0
        %v2149 = vadd.f32 0.0, %v2148
        %2150 = vmatmul.bf16.gmra.mxu0 %v1524
        %v2151 = vpop.f32.mrf.mxu0
        %v2152 = vadd.f32 0.0, %v2151
        %v2153 = vpop.f32.mrf.mxu0
        %v2154 = vadd.f32 0.0, %v2153
        %2155 = vmatmul.bf16.gmra.mxu0 %v1526
        %v2156 = vpop.f32.mrf.mxu0
        %v2157 = vadd.f32 0.0, %v2156
        %v2158 = vpop.f32.mrf.mxu0
        %v2159 = vadd.f32 0.0, %v2158
        %2160 = vmatmul.bf16.gmra.mxu0 %v1528
        %v2161 = vpop.f32.mrf.mxu0
        %v2162 = vadd.f32 0.0, %v2161
        %v2163 = vpop.f32.mrf.mxu0
        %v2164 = vadd.f32 0.0, %v2163
        %2165 = vmatmul.bf16.gmra.mxu0 %v1530
        %v2166 = vpop.f32.mrf.mxu0
        %v2167 = vadd.f32 0.0, %v2166
        %v2168 = vpop.f32.mrf.mxu0
        %v2169 = vadd.f32 0.0, %v2168
        %2170 = vmatmul.bf16.gmra.mxu0 %v1532
        %v2171 = vpop.f32.mrf.mxu0
        %v2172 = vadd.f32 0.0, %v2171
        %v2173 = vpop.f32.mrf.mxu0
        %v2174 = vadd.f32 0.0, %v2173
        %2175 = vmatmul.bf16.gmra.mxu0 %v1534
        %v2176 = vpop.f32.mrf.mxu0
        %v2177 = vadd.f32 0.0, %v2176
        %v2178 = vpop.f32.mrf.mxu0
        %v2179 = vadd.f32 0.0, %v2178
        %2180 = vmatmul.bf16.gmra.mxu0 %v1536
        %v2181 = vpop.f32.mrf.mxu0
        %v2182 = vadd.f32 0.0, %v2181
        %v2183 = vpop.f32.mrf.mxu0
        %v2184 = vadd.f32 0.0, %v2183
        %2185 = vmatmul.bf16.gmra.mxu0 %v1538
        %v2186 = vpop.f32.mrf.mxu0
        %v2187 = vadd.f32 0.0, %v2186
        %v2188 = vpop.f32.mrf.mxu0
        %v2189 = vadd.f32 0.0, %v2188
        %2190 = vmatmul.bf16.gmra.mxu0 %v1540
        %v2191 = vpop.f32.mrf.mxu0
        %v2192 = vadd.f32 0.0, %v2191
        %v2193 = vpop.f32.mrf.mxu0
        %v2194 = vadd.f32 0.0, %v2193
        %2195 = vmatmul.bf16.gmra.mxu0 %v1542
        %v2196 = vpop.f32.mrf.mxu0
        %v2197 = vadd.f32 0.0, %v2196
        %v2198 = vpop.f32.mrf.mxu0
        %v2199 = vadd.f32 0.0, %v2198
        %2200 = vmatmul.bf16.gmra.mxu0 %v1544
        %v2201 = vpop.f32.mrf.mxu0
        %v2202 = vadd.f32 0.0, %v2201
        %v2203 = vpop.f32.mrf.mxu0
        %v2204 = vadd.f32 0.0, %v2203
        %2205 = vmatmul.bf16.gmra.mxu0 %v1546
        %v2206 = vpop.f32.mrf.mxu0
        %v2207 = vadd.f32 0.0, %v2206
        %v2208 = vpop.f32.mrf.mxu0
        %v2209 = vadd.f32 0.0, %v2208
        %2210 = vmatmul.bf16.gmra.mxu0 %v1548
        %v2211 = vpop.f32.mrf.mxu0
        %v2212 = vadd.f32 0.0, %v2211
        %v2213 = vpop.f32.mrf.mxu0
        %v2214 = vadd.f32 0.0, %v2213
        %2215 = vmatmul.bf16.gmra.mxu0 %v1550
        %v2216 = vpop.f32.mrf.mxu0
        %v2217 = vadd.f32 0.0, %v2216
        %v2218 = vpop.f32.mrf.mxu0
        %v2219 = vadd.f32 0.0, %v2218
        %2220 = vmatmul.bf16.gmra.mxu0 %v1552
        %v2221 = vpop.f32.mrf.mxu0
        %v2222 = vadd.f32 0.0, %v2221
        %v2223 = vpop.f32.mrf.mxu0
        %v2224 = vadd.f32 0.0, %v2223
        %2225 = vmatmul.bf16.gmra.mxu0 %v1554
        %v2226 = vpop.f32.mrf.mxu0
        %v2227 = vadd.f32 0.0, %v2226
        %v2228 = vpop.f32.mrf.mxu0
        %v2229 = vadd.f32 0.0, %v2228
        %2230 = vmatmul.bf16.gmra.mxu0 %v1556
        %v2231 = vpop.f32.mrf.mxu0
        %v2232 = vadd.f32 0.0, %v2231
        %v2233 = vpop.f32.mrf.mxu0
        %v2234 = vadd.f32 0.0, %v2233
        %2235 = vmatmul.bf16.gmra.mxu0 %v1558
        %v2236 = vpop.f32.mrf.mxu0
        %v2237 = vadd.f32 0.0, %v2236
        %v2238 = vpop.f32.mrf.mxu0
        %v2239 = vadd.f32 0.0, %v2238
        %2240 = vmatmul.bf16.gmra.mxu0 %v1560
        %v2241 = vpop.f32.mrf.mxu0
        %v2242 = vadd.f32 0.0, %v2241
        %v2243 = vpop.f32.mrf.mxu0
        %v2244 = vadd.f32 0.0, %v2243
        %2245 = vmatmul.bf16.gmra.mxu0 %v1562
        %v2246 = vpop.f32.mrf.mxu0
        %v2247 = vadd.f32 0.0, %v2246
        %v2248 = vpop.f32.mrf.mxu0
        %v2249 = vadd.f32 0.0, %v2248
        %2250 = vmatmul.bf16.gmra.mxu0 %v1564
        %v2251 = vpop.f32.mrf.mxu0
        %v2252 = vadd.f32 0.0, %v2251
        %v2253 = vpop.f32.mrf.mxu0
        %v2254 = vadd.f32 0.0, %v2253
        %2255 = vmatmul.bf16.gmra.mxu0 %v1566
        %v2256 = vpop.f32.mrf.mxu0
        %v2257 = vadd.f32 0.0, %v2256
        %v2258 = vpop.f32.mrf.mxu0
        %v2259 = vadd.f32 0.0, %v2258
        %2260 = vmatmul.bf16.gmra.mxu0 %v1568
        %v2261 = vpop.f32.mrf.mxu0
        %v2262 = vadd.f32 0.0, %v2261
        %v2263 = vpop.f32.mrf.mxu0
        %v2264 = vadd.f32 0.0, %v2263
        %2265 = vmatmul.bf16.gmra.mxu0 %v1570
        %v2266 = vpop.f32.mrf.mxu0
        %v2267 = vadd.f32 0.0, %v2266
        %v2268 = vpop.f32.mrf.mxu0
        %v2269 = vadd.f32 0.0, %v2268
        %2270 = vdwg.mxu0
        %2271 = vmatpush.bf16.msra.mxu0 %v1731
        %2272 = vmatpush.bf16.msra.mxu0 %v1729
        %2273 = vmatpush.bf16.msra.mxu0 %v1727
        %2274 = vmatpush.bf16.msra.mxu0 %v1725
        %2275 = vmatpush.bf16.msra.mxu0 %v1723
        %2276 = vmatpush.bf16.msra.mxu0 %v1721
        %2277 = vmatpush.bf16.msra.mxu0 %v1719
        %2278 = vmatpush.bf16.msra.mxu0 %v1717
        %2279 = vmatmul.bf16.gmra.mxu0 %v1509
        %v2280 = vpop.f32.mrf.mxu0
        %v2281 = vadd.f32 %v2112, %v2280
        %v2282 = vpop.f32.mrf.mxu0
        %v2283 = vadd.f32 %v2114, %v2282
        %2284 = vmatmul.bf16.gmra.mxu0 %v1511
        %v2285 = vpop.f32.mrf.mxu0
        %v2286 = vadd.f32 %v2117, %v2285
        %v2287 = vpop.f32.mrf.mxu0
        %v2288 = vadd.f32 %v2119, %v2287
        %2289 = vmatmul.bf16.gmra.mxu0 %v1513
        %v2290 = vpop.f32.mrf.mxu0
        %v2291 = vadd.f32 %v2122, %v2290
        %v2292 = vpop.f32.mrf.mxu0
        %v2293 = vadd.f32 %v2124, %v2292
        %2294 = vmatmul.bf16.gmra.mxu0 %v1515
        %v2295 = vpop.f32.mrf.mxu0
        %v2296 = vadd.f32 %v2127, %v2295
        %v2297 = vpop.f32.mrf.mxu0
        %v2298 = vadd.f32 %v2129, %v2297
        %2299 = vmatmul.bf16.gmra.mxu0 %v1517
        %v2300 = vpop.f32.mrf.mxu0
        %v2301 = vadd.f32 %v2132, %v2300
        %v2302 = vpop.f32.mrf.mxu0
        %v2303 = vadd.f32 %v2134, %v2302
        %2304 = vmatmul.bf16.gmra.mxu0 %v1519
        %v2305 = vpop.f32.mrf.mxu0
        %v2306 = vadd.f32 %v2137, %v2305
        %v2307 = vpop.f32.mrf.mxu0
        %v2308 = vadd.f32 %v2139, %v2307
        %2309 = vmatmul.bf16.gmra.mxu0 %v1521
        %v2310 = vpop.f32.mrf.mxu0
        %v2311 = vadd.f32 %v2142, %v2310
        %v2312 = vpop.f32.mrf.mxu0
        %v2313 = vadd.f32 %v2144, %v2312
        %2314 = vmatmul.bf16.gmra.mxu0 %v1523
        %v2315 = vpop.f32.mrf.mxu0
        %v2316 = vadd.f32 %v2147, %v2315
        %v2317 = vpop.f32.mrf.mxu0
        %v2318 = vadd.f32 %v2149, %v2317
        %2319 = vmatmul.bf16.gmra.mxu0 %v1525
        %v2320 = vpop.f32.mrf.mxu0
        %v2321 = vadd.f32 %v2152, %v2320
        %v2322 = vpop.f32.mrf.mxu0
        %v2323 = vadd.f32 %v2154, %v2322
        %2324 = vmatmul.bf16.gmra.mxu0 %v1527
        %v2325 = vpop.f32.mrf.mxu0
        %v2326 = vadd.f32 %v2157, %v2325
        %v2327 = vpop.f32.mrf.mxu0
        %v2328 = vadd.f32 %v2159, %v2327
        %2329 = vmatmul.bf16.gmra.mxu0 %v1529
        %v2330 = vpop.f32.mrf.mxu0
        %v2331 = vadd.f32 %v2162, %v2330
        %v2332 = vpop.f32.mrf.mxu0
        %v2333 = vadd.f32 %v2164, %v2332
        %2334 = vmatmul.bf16.gmra.mxu0 %v1531
        %v2335 = vpop.f32.mrf.mxu0
        %v2336 = vadd.f32 %v2167, %v2335
        %v2337 = vpop.f32.mrf.mxu0
        %v2338 = vadd.f32 %v2169, %v2337
        %2339 = vmatmul.bf16.gmra.mxu0 %v1533
        %v2340 = vpop.f32.mrf.mxu0
        %v2341 = vadd.f32 %v2172, %v2340
        %v2342 = vpop.f32.mrf.mxu0
        %v2343 = vadd.f32 %v2174, %v2342
        %2344 = vmatmul.bf16.gmra.mxu0 %v1535
        %v2345 = vpop.f32.mrf.mxu0
        %v2346 = vadd.f32 %v2177, %v2345
        %v2347 = vpop.f32.mrf.mxu0
        %v2348 = vadd.f32 %v2179, %v2347
        %2349 = vmatmul.bf16.gmra.mxu0 %v1537
        %v2350 = vpop.f32.mrf.mxu0
        %v2351 = vadd.f32 %v2182, %v2350
        %v2352 = vpop.f32.mrf.mxu0
        %v2353 = vadd.f32 %v2184, %v2352
        %2354 = vmatmul.bf16.gmra.mxu0 %v1539
        %v2355 = vpop.f32.mrf.mxu0
        %v2356 = vadd.f32 %v2187, %v2355
        %v2357 = vpop.f32.mrf.mxu0
        %v2358 = vadd.f32 %v2189, %v2357
        %2359 = vmatmul.bf16.gmra.mxu0 %v1541
        %v2360 = vpop.f32.mrf.mxu0
        %v2361 = vadd.f32 %v2192, %v2360
        %v2362 = vpop.f32.mrf.mxu0
        %v2363 = vadd.f32 %v2194, %v2362
        %2364 = vmatmul.bf16.gmra.mxu0 %v1543
        %v2365 = vpop.f32.mrf.mxu0
        %v2366 = vadd.f32 %v2197, %v2365
        %v2367 = vpop.f32.mrf.mxu0
        %v2368 = vadd.f32 %v2199, %v2367
        %2369 = vmatmul.bf16.gmra.mxu0 %v1545
        %v2370 = vpop.f32.mrf.mxu0
        %v2371 = vadd.f32 %v2202, %v2370
        %v2372 = vpop.f32.mrf.mxu0
        %v2373 = vadd.f32 %v2204, %v2372
        %2374 = vmatmul.bf16.gmra.mxu0 %v1547
        %v2375 = vpop.f32.mrf.mxu0
        %v2376 = vadd.f32 %v2207, %v2375
        %v2377 = vpop.f32.mrf.mxu0
        %v2378 = vadd.f32 %v2209, %v2377
        %2379 = vmatmul.bf16.gmra.mxu0 %v1549
        %v2380 = vpop.f32.mrf.mxu0
        %v2381 = vadd.f32 %v2212, %v2380
        %v2382 = vpop.f32.mrf.mxu0
        %v2383 = vadd.f32 %v2214, %v2382
        %2384 = vmatmul.bf16.gmra.mxu0 %v1551
        %v2385 = vpop.f32.mrf.mxu0
        %v2386 = vadd.f32 %v2217, %v2385
        %v2387 = vpop.f32.mrf.mxu0
        %v2388 = vadd.f32 %v2219, %v2387
        %2389 = vmatmul.bf16.gmra.mxu0 %v1553
        %v2390 = vpop.f32.mrf.mxu0
        %v2391 = vadd.f32 %v2222, %v2390
        %v2392 = vpop.f32.mrf.mxu0
        %v2393 = vadd.f32 %v2224, %v2392
        %2394 = vmatmul.bf16.gmra.mxu0 %v1555
        %v2395 = vpop.f32.mrf.mxu0
        %v2396 = vadd.f32 %v2227, %v2395
        %v2397 = vpop.f32.mrf.mxu0
        %v2398 = vadd.f32 %v2229, %v2397
        %2399 = vmatmul.bf16.gmra.mxu0 %v1557
        %v2400 = vpop.f32.mrf.mxu0
        %v2401 = vadd.f32 %v2232, %v2400
        %v2402 = vpop.f32.mrf.mxu0
        %v2403 = vadd.f32 %v2234, %v2402
        %2404 = vmatmul.bf16.gmra.mxu0 %v1559
        %v2405 = vpop.f32.mrf.mxu0
        %v2406 = vadd.f32 %v2237, %v2405
        %v2407 = vpop.f32.mrf.mxu0
        %v2408 = vadd.f32 %v2239, %v2407
        %2409 = vmatmul.bf16.gmra.mxu0 %v1561
        %v2410 = vpop.f32.mrf.mxu0
        %v2411 = vadd.f32 %v2242, %v2410
        %v2412 = vpop.f32.mrf.mxu0
        %v2413 = vadd.f32 %v2244, %v2412
        %2414 = vmatmul.bf16.gmra.mxu0 %v1563
        %v2415 = vpop.f32.mrf.mxu0
        %v2416 = vadd.f32 %v2247, %v2415
        %v2417 = vpop.f32.mrf.mxu0
        %v2418 = vadd.f32 %v2249, %v2417
        %2419 = vmatmul.bf16.gmra.mxu0 %v1565
        %v2420 = vpop.f32.mrf.mxu0
        %v2421 = vadd.f32 %v2252, %v2420
        %v2422 = vpop.f32.mrf.mxu0
        %v2423 = vadd.f32 %v2254, %v2422
        %2424 = vmatmul.bf16.gmra.mxu0 %v1567
        %v2425 = vpop.f32.mrf.mxu0
        %v2426 = vadd.f32 %v2257, %v2425
        %v2427 = vpop.f32.mrf.mxu0
        %v2428 = vadd.f32 %v2259, %v2427
        %2429 = vmatmul.bf16.gmra.mxu0 %v1569
        %v2430 = vpop.f32.mrf.mxu0
        %v2431 = vadd.f32 %v2262, %v2430
        %v2432 = vpop.f32.mrf.mxu0
        %v2433 = vadd.f32 %v2264, %v2432
        %2434 = vmatmul.bf16.gmra.mxu0 %v1571
        %v2435 = vpop.f32.mrf.mxu0
        %v2436 = vadd.f32 %v2267, %v2435
        %v2437 = vpop.f32.mrf.mxu0
        %v2438 = vadd.f32 %v2269, %v2437
        %2439 = vdwg.mxu0
        %v2440 = vrcp.pop %v1943
        %v2441 = vrcp.pop %v2281
        %v2442 = vrcp.pop %v1945
        %v2443 = vrcp.pop %v2283
        %v2444 = vrcp.pop %v1948
        %v2445 = vrcp.pop %v2286
        %v2446 = vrcp.pop %v1950
        %v2447 = vrcp.pop %v2288
        %v2448 = vrcp.pop %v1953
        %v2449 = vrcp.pop %v2291
        %v2450 = vrcp.pop %v1955
        %v2451 = vrcp.pop %v2293
        %v2452 = vrcp.pop %v1958
        %v2453 = vrcp.pop %v2296
        %v2454 = vrcp.pop %v1960
        %v2455 = vrcp.pop %v2298
        %v2456 = vrcp.pop %v1963
        %v2457 = vrcp.pop %v2301
        %v2458 = vrcp.pop %v1965
        %v2459 = vrcp.pop %v2303
        %v2460 = vrcp.pop %v1968
        %v2461 = vrcp.pop %v2306
        %v2462 = vrcp.pop %v1970
        %v2463 = vrcp.pop %v2308
        %v2464 = vrcp.pop %v1973
        %v2465 = vrcp.pop %v2311
        %v2466 = vrcp.pop %v1975
        %v2467 = vrcp.pop %v2313
        %v2468 = vrcp.pop %v1978
        %v2469 = vrcp.pop %v2316
        %v2470 = vrcp.pop %v1980
        %v2471 = vrcp.pop %v2318
        %v2472 = vrcp.pop %v1983
        %v2473 = vrcp.pop %v2321
        %v2474 = vrcp.pop %v1985
        %v2475 = vrcp.pop %v2323
        %v2476 = vrcp.pop %v1988
        %v2477 = vrcp.pop %v2326
        %v2478 = vrcp.pop %v1990
        %v2479 = vrcp.pop %v2328
        %v2480 = vrcp.pop %v1993
        %v2481 = vrcp.pop %v2331
        %v2482 = vrcp.pop %v1995
        %v2483 = vrcp.pop %v2333
        %v2484 = vrcp.pop %v1998
        %v2485 = vrcp.pop %v2336
        %v2486 = vrcp.pop %v2000
        %v2487 = vrcp.pop %v2338
        %v2488 = vrcp.pop %v2003
        %v2489 = vrcp.pop %v2341
        %v2490 = vrcp.pop %v2005
        %v2491 = vrcp.pop %v2343
        %v2492 = vrcp.pop %v2008
        %v2493 = vrcp.pop %v2346
        %v2494 = vrcp.pop %v2010
        %v2495 = vrcp.pop %v2348
        %v2496 = vrcp.pop %v2013
        %v2497 = vrcp.pop %v2351
        %v2498 = vrcp.pop %v2015
        %v2499 = vrcp.pop %v2353
        %v2500 = vrcp.pop %v2018
        %v2501 = vrcp.pop %v2356
        %v2502 = vrcp.pop %v2020
        %v2503 = vrcp.pop %v2358
        %v2504 = vrcp.pop %v2023
        %v2505 = vrcp.pop %v2361
        %v2506 = vrcp.pop %v2025
        %v2507 = vrcp.pop %v2363
        %v2508 = vrcp.pop %v2028
        %v2509 = vrcp.pop %v2366
        %v2510 = vrcp.pop %v2030
        %v2511 = vrcp.pop %v2368
        %v2512 = vrcp.pop %v2033
        %v2513 = vrcp.pop %v2371
        %v2514 = vrcp.pop %v2035
        %v2515 = vrcp.pop %v2373
        %v2516 = vrcp.pop %v2038
        %v2517 = vrcp.pop %v2376
        %v2518 = vrcp.pop %v2040
        %v2519 = vrcp.pop %v2378
        %v2520 = vrcp.pop %v2043
        %v2521 = vrcp.pop %v2381
        %v2522 = vrcp.pop %v2045
        %v2523 = vrcp.pop %v2383
        %v2524 = vrcp.pop %v2048
        %v2525 = vrcp.pop %v2386
        %v2526 = vrcp.pop %v2050
        %v2527 = vrcp.pop %v2388
        %v2528 = vrcp.pop %v2053
        %v2529 = vrcp.pop %v2391
        %v2530 = vrcp.pop %v2055
        %v2531 = vrcp.pop %v2393
        %v2532 = vrcp.pop %v2058
        %v2533 = vrcp.pop %v2396
        %v2534 = vrcp.pop %v2060
        %v2535 = vrcp.pop %v2398
        %v2536 = vrcp.pop %v2063
        %v2537 = vrcp.pop %v2401
        %v2538 = vrcp.pop %v2065
        %v2539 = vrcp.pop %v2403
        %v2540 = vrcp.pop %v2068
        %v2541 = vrcp.pop %v2406
        %v2542 = vrcp.pop %v2070
        %v2543 = vrcp.pop %v2408
        %v2544 = vrcp.pop %v2073
        %v2545 = vrcp.pop %v2411
        %v2546 = vrcp.pop %v2075
        %v2547 = vrcp.pop %v2413
        %v2548 = vrcp.pop %v2078
        %v2549 = vrcp.pop %v2416
        %v2550 = vrcp.pop %v2080
        %v2551 = vrcp.pop %v2418
        %v2552 = vrcp.pop %v2083
        %v2553 = vrcp.pop %v2421
        %v2554 = vrcp.pop %v2085
        %v2555 = vrcp.pop %v2423
        %v2556 = vrcp.pop %v2088
        %v2557 = vrcp.pop %v2426
        %v2558 = vrcp.pop %v2090
        %v2559 = vrcp.pop %v2428
        %v2560 = vrcp.pop %v2093
        %v2561 = vrcp.pop %v2431
        %v2562 = vrcp.pop %v2095
        %v2563 = vrcp.pop %v2433
        %v2564 = vrcp.pop %v2098
        %v2565 = vrcp.pop %v2436
        %v2566 = vrcp.pop %v2100
        %v2567 = vrcp.pop %v2438
        %v2568 = vmul.f32 %v1253, %v2440
        %v2569 = vmul.f32 %v1255, %v2441
        %v2570 = vmul.f32 %v1257, %v2442
        %v2571 = vmul.f32 %v1259, %v2443
        %v2572 = vmul.f32 %v1261, %v2444
        %v2573 = vmul.f32 %v1263, %v2445
        %v2574 = vmul.f32 %v1265, %v2446
        %v2575 = vmul.f32 %v1267, %v2447
        %v2576 = vmul.f32 %v1269, %v2448
        %v2577 = vmul.f32 %v1271, %v2449
        %v2578 = vmul.f32 %v1273, %v2450
        %v2579 = vmul.f32 %v1275, %v2451
        %v2580 = vmul.f32 %v1277, %v2452
        %v2581 = vmul.f32 %v1279, %v2453
        %v2582 = vmul.f32 %v1281, %v2454
        %v2583 = vmul.f32 %v1283, %v2455
        %v2584 = vmul.f32 %v1285, %v2456
        %v2585 = vmul.f32 %v1287, %v2457
        %v2586 = vmul.f32 %v1289, %v2458
        %v2587 = vmul.f32 %v1291, %v2459
        %v2588 = vmul.f32 %v1293, %v2460
        %v2589 = vmul.f32 %v1295, %v2461
        %v2590 = vmul.f32 %v1297, %v2462
        %v2591 = vmul.f32 %v1299, %v2463
        %v2592 = vmul.f32 %v1301, %v2464
        %v2593 = vmul.f32 %v1303, %v2465
        %v2594 = vmul.f32 %v1305, %v2466
        %v2595 = vmul.f32 %v1307, %v2467
        %v2596 = vmul.f32 %v1309, %v2468
        %v2597 = vmul.f32 %v1311, %v2469
        %v2598 = vmul.f32 %v1313, %v2470
        %v2599 = vmul.f32 %v1315, %v2471
        %v2600 = vmul.f32 %v1317, %v2472
        %v2601 = vmul.f32 %v1319, %v2473
        %v2602 = vmul.f32 %v1321, %v2474
        %v2603 = vmul.f32 %v1323, %v2475
        %v2604 = vmul.f32 %v1325, %v2476
        %v2605 = vmul.f32 %v1327, %v2477
        %v2606 = vmul.f32 %v1329, %v2478
        %v2607 = vmul.f32 %v1331, %v2479
        %v2608 = vmul.f32 %v1333, %v2480
        %v2609 = vmul.f32 %v1335, %v2481
        %v2610 = vmul.f32 %v1337, %v2482
        %v2611 = vmul.f32 %v1339, %v2483
        %v2612 = vmul.f32 %v1341, %v2484
        %v2613 = vmul.f32 %v1343, %v2485
        %v2614 = vmul.f32 %v1345, %v2486
        %v2615 = vmul.f32 %v1347, %v2487
        %v2616 = vmul.f32 %v1349, %v2488
        %v2617 = vmul.f32 %v1351, %v2489
        %v2618 = vmul.f32 %v1353, %v2490
        %v2619 = vmul.f32 %v1355, %v2491
        %v2620 = vmul.f32 %v1357, %v2492
        %v2621 = vmul.f32 %v1359, %v2493
        %v2622 = vmul.f32 %v1361, %v2494
        %v2623 = vmul.f32 %v1363, %v2495
        %v2624 = vmul.f32 %v1365, %v2496
        %v2625 = vmul.f32 %v1367, %v2497
        %v2626 = vmul.f32 %v1369, %v2498
        %v2627 = vmul.f32 %v1371, %v2499
        %v2628 = vmul.f32 %v1373, %v2500
        %v2629 = vmul.f32 %v1375, %v2501
        %v2630 = vmul.f32 %v1377, %v2502
        %v2631 = vmul.f32 %v1379, %v2503
        %v2632 = vmul.f32 %v1381, %v2504
        %v2633 = vmul.f32 %v1383, %v2505
        %v2634 = vmul.f32 %v1385, %v2506
        %v2635 = vmul.f32 %v1387, %v2507
        %v2636 = vmul.f32 %v1389, %v2508
        %v2637 = vmul.f32 %v1391, %v2509
        %v2638 = vmul.f32 %v1393, %v2510
        %v2639 = vmul.f32 %v1395, %v2511
        %v2640 = vmul.f32 %v1397, %v2512
        %v2641 = vmul.f32 %v1399, %v2513
        %v2642 = vmul.f32 %v1401, %v2514
        %v2643 = vmul.f32 %v1403, %v2515
        %v2644 = vmul.f32 %v1405, %v2516
        %v2645 = vmul.f32 %v1407, %v2517
        %v2646 = vmul.f32 %v1409, %v2518
        %v2647 = vmul.f32 %v1411, %v2519
        %v2648 = vmul.f32 %v1413, %v2520
        %v2649 = vmul.f32 %v1415, %v2521
        %v2650 = vmul.f32 %v1417, %v2522
        %v2651 = vmul.f32 %v1419, %v2523
        %v2652 = vmul.f32 %v1421, %v2524
        %v2653 = vmul.f32 %v1423, %v2525
        %v2654 = vmul.f32 %v1425, %v2526
        %v2655 = vmul.f32 %v1427, %v2527
        %v2656 = vmul.f32 %v1429, %v2528
        %v2657 = vmul.f32 %v1431, %v2529
        %v2658 = vmul.f32 %v1433, %v2530
        %v2659 = vmul.f32 %v1435, %v2531
        %v2660 = vmul.f32 %v1437, %v2532
        %v2661 = vmul.f32 %v1439, %v2533
        %v2662 = vmul.f32 %v1441, %v2534
        %v2663 = vmul.f32 %v1443, %v2535
        %v2664 = vmul.f32 %v1445, %v2536
        %v2665 = vmul.f32 %v1447, %v2537
        %v2666 = vmul.f32 %v1449, %v2538
        %v2667 = vmul.f32 %v1451, %v2539
        %v2668 = vmul.f32 %v1453, %v2540
        %v2669 = vmul.f32 %v1455, %v2541
        %v2670 = vmul.f32 %v1457, %v2542
        %v2671 = vmul.f32 %v1459, %v2543
        %v2672 = vmul.f32 %v1461, %v2544
        %v2673 = vmul.f32 %v1463, %v2545
        %v2674 = vmul.f32 %v1465, %v2546
        %v2675 = vmul.f32 %v1467, %v2547
        %v2676 = vmul.f32 %v1469, %v2548
        %v2677 = vmul.f32 %v1471, %v2549
        %v2678 = vmul.f32 %v1473, %v2550
        %v2679 = vmul.f32 %v1475, %v2551
        %v2680 = vmul.f32 %v1477, %v2552
        %v2681 = vmul.f32 %v1479, %v2553
        %v2682 = vmul.f32 %v1481, %v2554
        %v2683 = vmul.f32 %v1483, %v2555
        %v2684 = vmul.f32 %v1485, %v2556
        %v2685 = vmul.f32 %v1487, %v2557
        %v2686 = vmul.f32 %v1489, %v2558
        %v2687 = vmul.f32 %v1491, %v2559
        %v2688 = vmul.f32 %v1493, %v2560
        %v2689 = vmul.f32 %v1495, %v2561
        %v2690 = vmul.f32 %v1497, %v2562
        %v2691 = vmul.f32 %v1499, %v2563
        %v2692 = vmul.f32 %v1501, %v2564
        %v2693 = vmul.f32 %v1503, %v2565
        %v2694 = vmul.f32 %v1505, %v2566
        %v2695 = vmul.f32 %v1507, %v2567
        %v2696 = vadd.f32 %v268, %v2568
        %v2697 = vadd.f32 %v269, %v2570
        %v2698 = vadd.f32 %v270, %v2572
        %v2699 = vadd.f32 %v271, %v2574
        %v2700 = vadd.f32 %v272, %v2576
        %v2701 = vadd.f32 %v273, %v2578
        %v2702 = vadd.f32 %v274, %v2580
        %v2703 = vadd.f32 %v275, %v2582
        %v2704 = vadd.f32 %v276, %v2584
        %v2705 = vadd.f32 %v277, %v2586
        %v2706 = vadd.f32 %v278, %v2588
        %v2707 = vadd.f32 %v279, %v2590
        %v2708 = vadd.f32 %v280, %v2592
        %v2709 = vadd.f32 %v281, %v2594
        %v2710 = vadd.f32 %v282, %v2596
        %v2711 = vadd.f32 %v283, %v2598
        %v2712 = vadd.f32 %v284, %v2600
        %v2713 = vadd.f32 %v285, %v2602
        %v2714 = vadd.f32 %v286, %v2604
        %v2715 = vadd.f32 %v287, %v2606
        %v2716 = vadd.f32 %v288, %v2608
        %v2717 = vadd.f32 %v289, %v2610
        %v2718 = vadd.f32 %v290, %v2612
        %v2719 = vadd.f32 %v291, %v2614
        %v2720 = vadd.f32 %v292, %v2616
        %v2721 = vadd.f32 %v293, %v2618
        %v2722 = vadd.f32 %v294, %v2620
        %v2723 = vadd.f32 %v295, %v2622
        %v2724 = vadd.f32 %v296, %v2624
        %v2725 = vadd.f32 %v297, %v2626
        %v2726 = vadd.f32 %v298, %v2628
        %v2727 = vadd.f32 %v299, %v2630
        %v2728 = vadd.f32 %v300, %v2632
        %v2729 = vadd.f32 %v301, %v2634
        %v2730 = vadd.f32 %v302, %v2636
        %v2731 = vadd.f32 %v303, %v2638
        %v2732 = vadd.f32 %v304, %v2640
        %v2733 = vadd.f32 %v305, %v2642
        %v2734 = vadd.f32 %v306, %v2644
        %v2735 = vadd.f32 %v307, %v2646
        %v2736 = vadd.f32 %v308, %v2648
        %v2737 = vadd.f32 %v309, %v2650
        %v2738 = vadd.f32 %v310, %v2652
        %v2739 = vadd.f32 %v311, %v2654
        %v2740 = vadd.f32 %v312, %v2656
        %v2741 = vadd.f32 %v313, %v2658
        %v2742 = vadd.f32 %v314, %v2660
        %v2743 = vadd.f32 %v315, %v2662
        %v2744 = vadd.f32 %v316, %v2664
        %v2745 = vadd.f32 %v317, %v2666
        %v2746 = vadd.f32 %v318, %v2668
        %v2747 = vadd.f32 %v319, %v2670
        %v2748 = vadd.f32 %v320, %v2672
        %v2749 = vadd.f32 %v321, %v2674
        %v2750 = vadd.f32 %v322, %v2676
        %v2751 = vadd.f32 %v323, %v2678
        %v2752 = vadd.f32 %v324, %v2680
        %v2753 = vadd.f32 %v325, %v2682
        %v2754 = vadd.f32 %v326, %v2684
        %v2755 = vadd.f32 %v327, %v2686
        %v2756 = vadd.f32 %v328, %v2688
        %v2757 = vadd.f32 %v329, %v2690
        %v2758 = vadd.f32 %v330, %v2692
        %v2759 = vadd.f32 %v331, %v2694
        %v2760 = vadd.f32 %v2696, %v2569
        %v2761 = vadd.f32 %v2697, %v2571
        %v2762 = vadd.f32 %v2698, %v2573
        %v2763 = vadd.f32 %v2699, %v2575
        %v2764 = vadd.f32 %v2700, %v2577
        %v2765 = vadd.f32 %v2701, %v2579
        %v2766 = vadd.f32 %v2702, %v2581
        %v2767 = vadd.f32 %v2703, %v2583
        %v2768 = vadd.f32 %v2704, %v2585
        %v2769 = vadd.f32 %v2705, %v2587
        %v2770 = vadd.f32 %v2706, %v2589
        %v2771 = vadd.f32 %v2707, %v2591
        %v2772 = vadd.f32 %v2708, %v2593
        %v2773 = vadd.f32 %v2709, %v2595
        %v2774 = vadd.f32 %v2710, %v2597
        %v2775 = vadd.f32 %v2711, %v2599
        %v2776 = vadd.f32 %v2712, %v2601
        %v2777 = vadd.f32 %v2713, %v2603
        %v2778 = vadd.f32 %v2714, %v2605
        %v2779 = vadd.f32 %v2715, %v2607
        %v2780 = vadd.f32 %v2716, %v2609
        %v2781 = vadd.f32 %v2717, %v2611
        %v2782 = vadd.f32 %v2718, %v2613
        %v2783 = vadd.f32 %v2719, %v2615
        %v2784 = vadd.f32 %v2720, %v2617
        %v2785 = vadd.f32 %v2721, %v2619
        %v2786 = vadd.f32 %v2722, %v2621
        %v2787 = vadd.f32 %v2723, %v2623
        %v2788 = vadd.f32 %v2724, %v2625
        %v2789 = vadd.f32 %v2725, %v2627
        %v2790 = vadd.f32 %v2726, %v2629
        %v2791 = vadd.f32 %v2727, %v2631
        %v2792 = vadd.f32 %v2728, %v2633
        %v2793 = vadd.f32 %v2729, %v2635
        %v2794 = vadd.f32 %v2730, %v2637
        %v2795 = vadd.f32 %v2731, %v2639
        %v2796 = vadd.f32 %v2732, %v2641
        %v2797 = vadd.f32 %v2733, %v2643
        %v2798 = vadd.f32 %v2734, %v2645
        %v2799 = vadd.f32 %v2735, %v2647
        %v2800 = vadd.f32 %v2736, %v2649
        %v2801 = vadd.f32 %v2737, %v2651
        %v2802 = vadd.f32 %v2738, %v2653
        %v2803 = vadd.f32 %v2739, %v2655
        %v2804 = vadd.f32 %v2740, %v2657
        %v2805 = vadd.f32 %v2741, %v2659
        %v2806 = vadd.f32 %v2742, %v2661
        %v2807 = vadd.f32 %v2743, %v2663
        %v2808 = vadd.f32 %v2744, %v2665
        %v2809 = vadd.f32 %v2745, %v2667
        %v2810 = vadd.f32 %v2746, %v2669
        %v2811 = vadd.f32 %v2747, %v2671
        %v2812 = vadd.f32 %v2748, %v2673
        %v2813 = vadd.f32 %v2749, %v2675
        %v2814 = vadd.f32 %v2750, %v2677
        %v2815 = vadd.f32 %v2751, %v2679
        %v2816 = vadd.f32 %v2752, %v2681
        %v2817 = vadd.f32 %v2753, %v2683
        %v2818 = vadd.f32 %v2754, %v2685
        %v2819 = vadd.f32 %v2755, %v2687
        %v2820 = vadd.f32 %v2756, %v2689
        %v2821 = vadd.f32 %v2757, %v2691
        %v2822 = vadd.f32 %v2758, %v2693
        %v2823 = vadd.f32 %v2759, %v2695
        %2824 = vst [vmem:[%s265] sm:$0xff] %v2760
        %2825 = vst [vmem:[%s265 + $0x8] sm:$0xff] %v2761
        %2826 = vst [vmem:[%s265 + $0x10] sm:$0xff] %v2762
        %2827 = vst [vmem:[%s265 + $0x18] sm:$0xff] %v2763
        %2828 = vst [vmem:[%s265 + $0x20] sm:$0xff] %v2764
        %2829 = vst [vmem:[%s265 + $0x28] sm:$0xff] %v2765
        %2830 = vst [vmem:[%s265 + $0x30] sm:$0xff] %v2766
        %2831 = vst [vmem:[%s265 + $0x38] sm:$0xff] %v2767
        %2832 = vst [vmem:[%s265 + $0x40] sm:$0xff] %v2768
        %2833 = vst [vmem:[%s265 + $0x48] sm:$0xff] %v2769
        %2834 = vst [vmem:[%s265 + $0x50] sm:$0xff] %v2770
        %2835 = vst [vmem:[%s265 + $0x58] sm:$0xff] %v2771
        %2836 = vst [vmem:[%s265 + $0x60] sm:$0xff] %v2772
        %2837 = vst [vmem:[%s265 + $0x68] sm:$0xff] %v2773
        %2838 = vst [vmem:[%s265 + $0x70] sm:$0xff] %v2774
        %2839 = vst [vmem:[%s265 + $0x78] sm:$0xff] %v2775
        %2840 = vst [vmem:[%s265 + $0x80] sm:$0xff] %v2776
        %2841 = vst [vmem:[%s265 + $0x88] sm:$0xff] %v2777
        %2842 = vst [vmem:[%s265 + $0x90] sm:$0xff] %v2778
        %2843 = vst [vmem:[%s265 + $0x98] sm:$0xff] %v2779
        %2844 = vst [vmem:[%s265 + $0xa0] sm:$0xff] %v2780
        %2845 = vst [vmem:[%s265 + $0xa8] sm:$0xff] %v2781
        %2846 = vst [vmem:[%s265 + $0xb0] sm:$0xff] %v2782
        %2847 = vst [vmem:[%s265 + $0xb8] sm:$0xff] %v2783
        %2848 = vst [vmem:[%s265 + $0xc0] sm:$0xff] %v2784
        %2849 = vst [vmem:[%s265 + $0xc8] sm:$0xff] %v2785
        %2850 = vst [vmem:[%s265 + $0xd0] sm:$0xff] %v2786
        %2851 = vst [vmem:[%s265 + $0xd8] sm:$0xff] %v2787
        %2852 = vst [vmem:[%s265 + $0xe0] sm:$0xff] %v2788
        %2853 = vst [vmem:[%s265 + $0xe8] sm:$0xff] %v2789
        %2854 = vst [vmem:[%s265 + $0xf0] sm:$0xff] %v2790
        %2855 = vst [vmem:[%s265 + $0xf8] sm:$0xff] %v2791
        %2856 = vst [vmem:[%s265 + $0x100] sm:$0xff] %v2792
        %2857 = vst [vmem:[%s265 + $0x108] sm:$0xff] %v2793
        %2858 = vst [vmem:[%s265 + $0x110] sm:$0xff] %v2794
        %2859 = vst [vmem:[%s265 + $0x118] sm:$0xff] %v2795
        %2860 = vst [vmem:[%s265 + $0x120] sm:$0xff] %v2796
        %2861 = vst [vmem:[%s265 + $0x128] sm:$0xff] %v2797
        %2862 = vst [vmem:[%s265 + $0x130] sm:$0xff] %v2798
        %2863 = vst [vmem:[%s265 + $0x138] sm:$0xff] %v2799
        %2864 = vst [vmem:[%s265 + $0x140] sm:$0xff] %v2800
        %2865 = vst [vmem:[%s265 + $0x148] sm:$0xff] %v2801
        %2866 = vst [vmem:[%s265 + $0x150] sm:$0xff] %v2802
        %2867 = vst [vmem:[%s265 + $0x158] sm:$0xff] %v2803
        %2868 = vst [vmem:[%s265 + $0x160] sm:$0xff] %v2804
        %2869 = vst [vmem:[%s265 + $0x168] sm:$0xff] %v2805
        %2870 = vst [vmem:[%s265 + $0x170] sm:$0xff] %v2806
        %2871 = vst [vmem:[%s265 + $0x178] sm:$0xff] %v2807
        %2872 = vst [vmem:[%s265 + $0x180] sm:$0xff] %v2808
        %2873 = vst [vmem:[%s265 + $0x188] sm:$0xff] %v2809
        %2874 = vst [vmem:[%s265 + $0x190] sm:$0xff] %v2810
        %2875 = vst [vmem:[%s265 + $0x198] sm:$0xff] %v2811
        %2876 = vst [vmem:[%s265 + $0x1a0] sm:$0xff] %v2812
        %2877 = vst [vmem:[%s265 + $0x1a8] sm:$0xff] %v2813
        %2878 = vst [vmem:[%s265 + $0x1b0] sm:$0xff] %v2814
        %2879 = vst [vmem:[%s265 + $0x1b8] sm:$0xff] %v2815
        %2880 = vst [vmem:[%s265 + $0x1c0] sm:$0xff] %v2816
        %2881 = vst [vmem:[%s265 + $0x1c8] sm:$0xff] %v2817
        %2882 = vst [vmem:[%s265 + $0x1d0] sm:$0xff] %v2818
        %2883 = vst [vmem:[%s265 + $0x1d8] sm:$0xff] %v2819
        %2884 = vst [vmem:[%s265 + $0x1e0] sm:$0xff] %v2820
        %2885 = vst [vmem:[%s265 + $0x1e8] sm:$0xff] %v2821
        %2886 = vst [vmem:[%s265 + $0x1f0] sm:$0xff] %v2822
        %2887 = vst [vmem:[%s265 + $0x1f8] sm:$0xff] %v2823
        %s2888 = sand.u32 %s120, 1
        %s2889 = scalar_lea.sflag [#allocation4], %s2888
        %s2890 = sand.u32 %s120, 1
        %s2891 = smul.addr %s2890, 512
        %s2892 = scalar_lea.vmem [#allocation10], %s2891
        // Predicated region
        $region53: #{tpu_custom_call.1} parent=35 // pred_check
          %p2893 = pneg %p130
        $region54: #{tpu_custom_call.1} parent=35 // pred_check_branch
          %2895 = sbr.rel (%p2893) target = $region56
        $region55: #{tpu_custom_call.1} parent=35 // pred_region
          %s2896 = smul.u32 64, %s23
          %2898 = vsyncadd %s2889, 0
          %s2899 = smul.addr %s2896, 8
          %s2900 = scalar_lea.hbm %s4, %s2899
          %s2901 = sshll.u32 %s2892, 4
          %s2902 = int_to_ptr.vmem [resolvable:$true] %s2901
          %s2903 = sshll.u32 %s2900, 4
          %s2904 = int_to_ptr.hbm [resolvable:$true] %s2903
          %2909 = dma.vmem_to_hbm [thread:$0]  %s2902, 8192, %s2904, %s2889, 128, 128, 8
        $region56: #{tpu_custom_call.1} parent=35 // pred_fallthru
          _
      $region36: #{tpu_custom_call.1} parent=5 // pred_fallthru
        _
      %p2910 = scmp.le.s32.totalorder 2, %s18
      // Predicated region
      $region57: #{tpu_custom_call.1} parent=5 // pred_check
        %p2911 = pneg %p2910
      $region58: #{tpu_custom_call.1} parent=5 // pred_check_branch
        %2913 = sbr.rel (%p2911) target = $region60
      $region59: #{tpu_custom_call.1} parent=5 // pred_region
        %s2914 = ssub.s32 %s18, 2
        // Predicated region
        $region61: #{tpu_custom_call.1} parent=59 // pred_check
          %p2915 = pneg %p136
        $region62: #{tpu_custom_call.1} parent=59 // pred_check_branch
          %2917 = sbr.rel (%p2915) target = $region64
        $region63: #{tpu_custom_call.1} parent=59 // pred_region
          %s2918 = sand.u32 %s121, 1
          %s2919 = scalar_lea.sflag [#allocation4], %s2918
          %s2920 = sand.u32 %s121, 1
          %s2921 = smul.addr %s2920, 512
          %s2922 = scalar_lea.vmem [#allocation10], %s2921
          %2924 = dma.done %s2919, 8192
        $region64: #{tpu_custom_call.1} parent=59 // pred_fallthru
          _
      $region60: #{tpu_custom_call.1} parent=5 // pred_fallthru
        _
    $region6: #{tpu_custom_call.1} parent=1 // loop_footer
      %s22 = sadd.s32 1, %s18
    $region7: #{tpu_custom_call.1} parent=1 // loop_footer_branch
      %17 = sbr.rel target = $region3
    $region8: #{tpu_custom_call.1} parent=1 // loop_exit
      _
    %2925 = vsyncpa [#allocation3], 1
    %s2926 = scalar_lea.sflag [#allocation3], 1
    %2927 = vsyncpa %s2926, 1
    %2928 = vsyncpa [#allocation6], 1
    %2929 = vsyncpa [#allocation9], 1
    %2930 = vsyncpa [#allocation4], 1
    %s2931 = scalar_lea.sflag [#allocation4], 1
    %2932 = vsyncpa %s2931, 1

</llo_original>
